<compile_context>
chip_gen: v7x
topology: tpu7x:2x2x1
jax: 0.10.0
libtpu: 0.0.40
codegen_flags: <defaults>
</compile_context>

<pallas_src>
import functools

import jax
import jax.numpy as jnp
from jax.experimental import pallas as pl
from jax.experimental.pallas import tpu as pltpu


def _round_up(n, m):
    return ((n + m - 1) // m) * m


def _fused_conv_block_kernel(x_ref, w1_ref, b1_ref, mask_ref, w2_ref, b2_ref,
                             o_ref, *, H, W):
    """One batch element, both conv+BN+ReLU stages, channel-major flat layout.

    x_ref:    (1, Cin_p, Next)     zero-extended, flattened, padded input
    w1_ref:   (Cout_p, 9*Cin_p)    im2col layer-1 weights (BN1 scale folded in)
    b1_ref:   (Cout_p, 1)          BN1 shift
    mask_ref: (1, Ppad)            interior mask (re-pads layer-1 output)
    w2_ref:   (Cout_p, 9*Cout_p)   im2col layer-2 weights (BN2 scale folded in)
    b2_ref:   (Cout_p, 1)          BN2 shift
    o_ref:    (1, Cout_p, L)       flat (padded-width stride) output slab
    """
    Wp = W + 2
    Ppad = (H + 2) * Wp          # padded flat spatial size
    L = H * Wp - 2               # flat window covering every valid output pos.

    def conv3x3(xflat, w_col, length):
        # xflat: (C, >= 2*Wp + 2 + length); w_col: (Cout_p, 9*C).
        taps = []
        for dy in range(3):
            for dx in range(3):
                off = dy * Wp + dx
                taps.append(xflat[:, off:off + length])      # lane-shifted slice
        xcol = jnp.concatenate(taps, axis=0)                 # (9*C, length)
        return jnp.dot(w_col, xcol,
                       preferred_element_type=jnp.float32,
                       precision=jax.lax.Precision.HIGHEST)

    # Layer 1: conv + folded-BN + ReLU, evaluated on the FULL padded grid so the
    # result is already in layer-2's padded layout (after masking the halo).
    x1 = x_ref[0]                                            # (Cin_p, Next)
    s1 = conv3x3(x1, w1_ref[...], Ppad) + b1_ref[...]        # (Cout_p, Ppad)
    s1 = jnp.maximum(s1, 0.0)
    x2 = s1 * mask_ref[...]                                  # zero the halo

    # Layer 2: conv + folded-BN + ReLU at the valid output positions.
    y2 = conv3x3(x2, w2_ref[...], L) + b2_ref[...]           # (Cout_p, L)
    o_ref[...] = jnp.maximum(y2, 0.0)[None].astype(o_ref.dtype)


@jax.jit
def conv_block_apply(x_nchw, params):
    """conv_block.forward: NCHW in, NCHW out (fused single-kernel version)."""
    N, Cin, H, W = x_nchw.shape
    Cout = params["w1"].shape[0]
    Hp, Wp = H + 2, W + 2
    Ppad, L = Hp * Wp, H * Wp - 2
    Cin_p = _round_up(Cin, 8)          # sublane-aligned channel counts
    Cout_p = _round_up(Cout, 8)

    # ---- host-side parameter prep: im2col ordering + BN-scale folding -------
    def prep_w(w_oihw, scale, cin_p, cout_p):
        co, ci = w_oihw.shape[:2]
        w = jnp.pad(w_oihw, ((0, cout_p - co), (0, cin_p - ci), (0, 0), (0, 0)))
        w_col = jnp.transpose(w, (0, 2, 3, 1)).reshape(cout_p, 9 * cin_p)
        scale_p = jnp.pad(scale, (0, cout_p - co))
        return (w_col * scale_p[:, None]).astype(jnp.float32)

    def prep_b(shift, cout_p):
        s = jnp.pad(shift, (0, cout_p - shift.shape[0]))
        return s.reshape(cout_p, 1).astype(jnp.float32)

    w1c = prep_w(params["w1"], params["bn1_scale"], Cin_p, Cout_p)
    w2c = prep_w(params["w2"], params["bn2_scale"], Cout_p, Cout_p)
    b1 = prep_b(params["bn1_shift"], Cout_p)
    b2 = prep_b(params["bn2_shift"], Cout_p)

    # ---- tiny input prep: pad channels + 1px halo, flatten, add flat slack ---
    xp = jnp.pad(x_nchw, ((0, 0), (0, Cin_p - Cin), (1, 1), (1, 1)))
    xE = jnp.pad(xp.reshape(N, Cin_p, Ppad).astype(jnp.float32),
                 ((0, 0), (0, 0), (Wp + 1, Wp + 1)))
    Next = Ppad + 2 * (Wp + 1)

    # Interior mask used in-kernel to re-pad the layer-1 activation.
    q = jnp.arange(Ppad)
    r, c = q // Wp, q % Wp
    mask = (((r >= 1) & (r <= H) & (c >= 1) & (c <= W))
            .astype(jnp.float32).reshape(1, Ppad))

    kernel = functools.partial(_fused_conv_block_kernel, H=H, W=W)
    out_flat = pl.pallas_call(
        kernel,
        out_shape=jax.ShapeDtypeStruct((N, Cout_p, L), jnp.float32),
        grid_spec=pltpu.PrefetchScalarGridSpec(
            num_scalar_prefetch=0,
            grid=(N,),
            in_specs=[
                pl.BlockSpec((1, Cin_p, Next), lambda b: (b, 0, 0)),
                pl.BlockSpec((Cout_p, 9 * Cin_p), lambda b: (0, 0)),
                pl.BlockSpec((Cout_p, 1), lambda b: (0, 0)),
                pl.BlockSpec((1, Ppad), lambda b: (0, 0)),
                pl.BlockSpec((Cout_p, 9 * Cout_p), lambda b: (0, 0)),
                pl.BlockSpec((Cout_p, 1), lambda b: (0, 0)),
            ],
            out_specs=pl.BlockSpec((1, Cout_p, L), lambda b: (b, 0, 0)),
        ),
        compiler_params=pltpu.CompilerParams(
            dimension_semantics=("parallel",)),
    )(xE, w1c, b1, mask, w2c, b2)

    # Crop back to NCHW: pad flat slab to H*Wp, reshape, drop halo cols / pad ch.
    out = jnp.pad(out_flat, ((0, 0), (0, 0), (0, H * Wp - L)))
    return out.reshape(N, Cout_p, H, Wp)[:, :Cout, :, :W]


def make_conv_block_params(key, in_channels, out_channels):
    """Deterministic synthetic parameters matching the PyTorch module shapes."""
    ks = jax.random.split(key, 10)
    eps = 1e-5

    def bn_params(k_gamma, k_beta, k_mean, k_var, c):
        gamma = 1.0 + 0.1 * jax.random.normal(k_gamma, (c,), jnp.float32)
        beta = 0.1 * jax.random.normal(k_beta, (c,), jnp.float32)
        running_mean = 0.05 * jax.random.normal(k_mean, (c,), jnp.float32)
        running_var = 1.0 + 0.1 * jax.nn.softplus(
            jax.random.normal(k_var, (c,), jnp.float32))
        scale = gamma / jnp.sqrt(running_var + eps)
        shift = beta - running_mean * scale
        return scale, shift

    # PyTorch conv weights are OIHW; keep them OIHW (the wrapper re-packs them).
    w1 = 0.1 * jax.random.normal(
        ks[0], (out_channels, in_channels, 3, 3), jnp.float32)
    w2 = 0.1 * jax.random.normal(
        ks[1], (out_channels, out_channels, 3, 3), jnp.float32)
    s1, sh1 = bn_params(ks[2], ks[3], ks[4], ks[5], out_channels)
    s2, sh2 = bn_params(ks[6], ks[7], ks[8], ks[9], out_channels)
    return {"w1": w1, "bn1_scale": s1, "bn1_shift": sh1,
            "w2": w2, "bn2_scale": s2, "bn2_shift": sh2}


def _reference_conv_block(x, params):
    """Pure-JAX reference (lax.conv) for a correctness cross-check."""
    def conv_bn_relu(h, w, scale, shift):
        h = jax.lax.conv_general_dilated(
            h, w, window_strides=(1, 1), padding=((1, 1), (1, 1)),
            dimension_numbers=("NCHW", "OIHW", "NCHW"),
            precision=jax.lax.Precision.HIGHEST)
        h = h * scale[None, :, None, None] + shift[None, :, None, None]
        return jnp.maximum(h, 0.0)

    h = conv_bn_relu(x, params["w1"], params["bn1_scale"], params["bn1_shift"])
    return conv_bn_relu(h, params["w2"], params["bn2_scale"], params["bn2_shift"])


if __name__ == "__main__":
    key = jax.random.PRNGKey(0)
    k_x, k_p = jax.random.split(key)

    N, C_in, C_out, H, W = 2, 4, 8, 16, 16
    x = jax.random.normal(k_x, (N, C_in, H, W), jnp.float32)
    params = make_conv_block_params(k_p, C_in, C_out)

    out = jax.block_until_ready(conv_block_apply(x, params))

    assert out.shape == (N, C_out, H, W), out.shape
    assert bool(jnp.all(jnp.isfinite(out)))
    assert bool(jnp.all(out >= 0.0))  # final ReLU

    ref = _reference_conv_block(x, params)
    max_err = float(jnp.max(jnp.abs(out - ref)))
    assert bool(jnp.allclose(out, ref, atol=5e-2, rtol=5e-2)), max_err

    print("KERNEL_OK")
</pallas_src>

<mosaic_0001>
module attributes {stable_mosaic.version = 11 : i64} {
  func.func @_fused_conv_block_kernel(%arg0: i32, %arg1: memref<1x8x362xf32, #tpu.memory_space<vmem>>, %arg2: memref<8x72xf32, #tpu.memory_space<vmem>>, %arg3: memref<8x1xf32, #tpu.memory_space<vmem>>, %arg4: memref<1x324xf32, #tpu.memory_space<vmem>>, %arg5: memref<8x72xf32, #tpu.memory_space<vmem>>, %arg6: memref<8x1xf32, #tpu.memory_space<vmem>>, %arg7: memref<1x8x286xf32, #tpu.memory_space<vmem>>) attributes {dimension_semantics = [#tpu.dimension_semantics<parallel>], iteration_bounds = array<i64: 2>, scalar_prefetch = 0 : i64, scratch_operands = 0 : i64, tpu.core_type = #tpu.core_type<tc>, window_params = [{transform_indices = @transform_0, window_bounds = array<i64: 1, 8, 362>}, {pipeline_mode = #tpu.pipeline_mode<synchronous>, transform_indices = @transform_1, window_bounds = array<i64: 8, 72>}, {pipeline_mode = #tpu.pipeline_mode<synchronous>, transform_indices = @transform_2, window_bounds = array<i64: 8, 1>}, {pipeline_mode = #tpu.pipeline_mode<synchronous>, transform_indices = @transform_3, window_bounds = array<i64: 1, 324>}, {pipeline_mode = #tpu.pipeline_mode<synchronous>, transform_indices = @transform_4, window_bounds = array<i64: 8, 72>}, {pipeline_mode = #tpu.pipeline_mode<synchronous>, transform_indices = @transform_5, window_bounds = array<i64: 8, 1>}, {transform_indices = @transform_6, window_bounds = array<i64: 1, 8, 286>}]} {
    %c0 = arith.constant 0 : index
    %c0_0 = arith.constant 0 : index
    %c0_1 = arith.constant 0 : index
    %0 = vector.load %arg1[%c0, %c0_0, %c0_1] : memref<1x8x362xf32, #tpu.memory_space<vmem>>, vector<1x8x362xf32>
    %1 = vector.shape_cast %0 : vector<1x8x362xf32> to vector<8x362xf32>
    %c0_2 = arith.constant 0 : index
    %c0_3 = arith.constant 0 : index
    %2 = vector.load %arg2[%c0_2, %c0_3] : memref<8x72xf32, #tpu.memory_space<vmem>>, vector<8x72xf32>
    %3 = vector.extract_strided_slice %1 {offsets = [0, 0], sizes = [8, 324], strides = [1, 1]} : vector<8x362xf32> to vector<8x324xf32>
    %4 = vector.extract_strided_slice %1 {offsets = [0, 1], sizes = [8, 324], strides = [1, 1]} : vector<8x362xf32> to vector<8x324xf32>
    %5 = vector.extract_strided_slice %1 {offsets = [0, 2], sizes = [8, 324], strides = [1, 1]} : vector<8x362xf32> to vector<8x324xf32>
    %6 = vector.extract_strided_slice %1 {offsets = [0, 18], sizes = [8, 324], strides = [1, 1]} : vector<8x362xf32> to vector<8x324xf32>
    %7 = vector.extract_strided_slice %1 {offsets = [0, 19], sizes = [8, 324], strides = [1, 1]} : vector<8x362xf32> to vector<8x324xf32>
    %8 = vector.extract_strided_slice %1 {offsets = [0, 20], sizes = [8, 324], strides = [1, 1]} : vector<8x362xf32> to vector<8x324xf32>
    %9 = vector.extract_strided_slice %1 {offsets = [0, 36], sizes = [8, 324], strides = [1, 1]} : vector<8x362xf32> to vector<8x324xf32>
    %10 = vector.extract_strided_slice %1 {offsets = [0, 37], sizes = [8, 324], strides = [1, 1]} : vector<8x362xf32> to vector<8x324xf32>
    %11 = vector.extract_strided_slice %1 {offsets = [0, 38], sizes = [8, 324], strides = [1, 1]} : vector<8x362xf32> to vector<8x324xf32>
    %12 = tpu.concatenate %3, %4, %5, %6, %7, %8, %9, %10, %11 in 0 : vector<8x324xf32>, vector<8x324xf32>, vector<8x324xf32>, vector<8x324xf32>, vector<8x324xf32>, vector<8x324xf32>, vector<8x324xf32>, vector<8x324xf32>, vector<8x324xf32> -> vector<72x324xf32>
    %cst = arith.constant dense<0.000000e+00> : vector<8x324xf32>
    %13 = tpu.matmul %2, %12, %cst {dimension_numbers = #tpu.dot_dimension_numbers<[1], [0], [0], [1], [0, 0, 1, 1], [], []>, precision = #tpu.contract_precision<fp32>} : vector<8x72xf32>, vector<72x324xf32>, vector<8x324xf32> -> vector<8x324xf32>
    %c0_4 = arith.constant 0 : index
    %c0_5 = arith.constant 0 : index
    %14 = vector.load %arg3[%c0_4, %c0_5] : memref<8x1xf32, #tpu.memory_space<vmem>>, vector<8x1xf32>
    %15 = vector.broadcast %14 : vector<8x1xf32> to vector<8x324xf32>
    %16 = arith.addf %13, %15 : vector<8x324xf32>
    %cst_6 = arith.constant 0.000000e+00 : f32
    %17 = vector.broadcast %cst_6 : f32 to vector<8x324xf32>
    %18 = arith.maximumf %16, %17 : vector<8x324xf32>
    %c0_7 = arith.constant 0 : index
    %c0_8 = arith.constant 0 : index
    %19 = vector.load %arg4[%c0_7, %c0_8] : memref<1x324xf32, #tpu.memory_space<vmem>>, vector<1x324xf32>
    %20 = vector.broadcast %19 : vector<1x324xf32> to vector<8x324xf32>
    %21 = arith.mulf %18, %20 : vector<8x324xf32>
    %c0_9 = arith.constant 0 : index
    %c0_10 = arith.constant 0 : index
    %22 = vector.load %arg5[%c0_9, %c0_10] : memref<8x72xf32, #tpu.memory_space<vmem>>, vector<8x72xf32>
    %23 = vector.extract_strided_slice %21 {offsets = [0, 0], sizes = [8, 286], strides = [1, 1]} : vector<8x324xf32> to vector<8x286xf32>
    %24 = vector.extract_strided_slice %21 {offsets = [0, 1], sizes = [8, 286], strides = [1, 1]} : vector<8x324xf32> to vector<8x286xf32>
    %25 = vector.extract_strided_slice %21 {offsets = [0, 2], sizes = [8, 286], strides = [1, 1]} : vector<8x324xf32> to vector<8x286xf32>
    %26 = vector.extract_strided_slice %21 {offsets = [0, 18], sizes = [8, 286], strides = [1, 1]} : vector<8x324xf32> to vector<8x286xf32>
    %27 = vector.extract_strided_slice %21 {offsets = [0, 19], sizes = [8, 286], strides = [1, 1]} : vector<8x324xf32> to vector<8x286xf32>
    %28 = vector.extract_strided_slice %21 {offsets = [0, 20], sizes = [8, 286], strides = [1, 1]} : vector<8x324xf32> to vector<8x286xf32>
    %29 = vector.extract_strided_slice %21 {offsets = [0, 36], sizes = [8, 286], strides = [1, 1]} : vector<8x324xf32> to vector<8x286xf32>
    %30 = vector.extract_strided_slice %21 {offsets = [0, 37], sizes = [8, 286], strides = [1, 1]} : vector<8x324xf32> to vector<8x286xf32>
    %31 = vector.extract_strided_slice %21 {offsets = [0, 38], sizes = [8, 286], strides = [1, 1]} : vector<8x324xf32> to vector<8x286xf32>
    %32 = tpu.concatenate %23, %24, %25, %26, %27, %28, %29, %30, %31 in 0 : vector<8x286xf32>, vector<8x286xf32>, vector<8x286xf32>, vector<8x286xf32>, vector<8x286xf32>, vector<8x286xf32>, vector<8x286xf32>, vector<8x286xf32>, vector<8x286xf32> -> vector<72x286xf32>
    %cst_11 = arith.constant dense<0.000000e+00> : vector<8x286xf32>
    %33 = tpu.matmul %22, %32, %cst_11 {dimension_numbers = #tpu.dot_dimension_numbers<[1], [0], [0], [1], [0, 0, 1, 1], [], []>, precision = #tpu.contract_precision<fp32>} : vector<8x72xf32>, vector<72x286xf32>, vector<8x286xf32> -> vector<8x286xf32>
    %c0_12 = arith.constant 0 : index
    %c0_13 = arith.constant 0 : index
    %34 = vector.load %arg6[%c0_12, %c0_13] : memref<8x1xf32, #tpu.memory_space<vmem>>, vector<8x1xf32>
    %35 = vector.broadcast %34 : vector<8x1xf32> to vector<8x286xf32>
    %36 = arith.addf %33, %35 : vector<8x286xf32>
    %cst_14 = arith.constant 0.000000e+00 : f32
    %37 = vector.broadcast %cst_14 : f32 to vector<8x286xf32>
    %38 = arith.maximumf %36, %37 : vector<8x286xf32>
    %39 = vector.shape_cast %38 : vector<8x286xf32> to vector<1x8x286xf32>
    %c0_15 = arith.constant 0 : index
    %c0_16 = arith.constant 0 : index
    %c0_17 = arith.constant 0 : index
    %40 = vector.load %arg7[%c0_15, %c0_16, %c0_17] : memref<1x8x286xf32, #tpu.memory_space<vmem>>, vector<1x8x286xf32>
    tpu.vector_store %arg7[%c0_15, %c0_16, %c0_17], %39 {strides = array<i32>} : memref<1x8x286xf32, #tpu.memory_space<vmem>>, vector<1x8x286xf32>,
    return
  }
  func.func @transform_0(%arg0: i32) -> (i32, i32, i32) {
    %c0_i32 = arith.constant 0 : i32
    %c0_i32_0 = arith.constant 0 : i32
    %c0_i32_1 = arith.constant 0 : i32
    return %arg0, %c0_i32, %c0_i32_0 : i32, i32, i32
  }
  func.func @transform_1(%arg0: i32) -> (i32, i32) {
    %c0_i32 = arith.constant 0 : i32
    %c0_i32_0 = arith.constant 0 : i32
    %c0_i32_1 = arith.constant 0 : i32
    return %c0_i32, %c0_i32_0 : i32, i32
  }
  func.func @transform_2(%arg0: i32) -> (i32, i32) {
    %c0_i32 = arith.constant 0 : i32
    %c0_i32_0 = arith.constant 0 : i32
    %c0_i32_1 = arith.constant 0 : i32
    return %c0_i32, %c0_i32_0 : i32, i32
  }
  func.func @transform_3(%arg0: i32) -> (i32, i32) {
    %c0_i32 = arith.constant 0 : i32
    %c0_i32_0 = arith.constant 0 : i32
    %c0_i32_1 = arith.constant 0 : i32
    return %c0_i32, %c0_i32_0 : i32, i32
  }
  func.func @transform_4(%arg0: i32) -> (i32, i32) {
    %c0_i32 = arith.constant 0 : i32
    %c0_i32_0 = arith.constant 0 : i32
    %c0_i32_1 = arith.constant 0 : i32
    return %c0_i32, %c0_i32_0 : i32, i32
  }
  func.func @transform_5(%arg0: i32) -> (i32, i32) {
    %c0_i32 = arith.constant 0 : i32
    %c0_i32_0 = arith.constant 0 : i32
    %c0_i32_1 = arith.constant 0 : i32
    return %c0_i32, %c0_i32_0 : i32, i32
  }
  func.func @transform_6(%arg0: i32) -> (i32, i32, i32) {
    %c0_i32 = arith.constant 0 : i32
    %c0_i32_0 = arith.constant 0 : i32
    %c0_i32_1 = arith.constant 0 : i32
    return %arg0, %c0_i32, %c0_i32_0 : i32, i32, i32
  }
}

</mosaic_0001>

<llo_original>
// kernel: conv_block_apply.1
$region0: #{conv_block_apply.1}
  #allocation0 [shape = 'u32[]', space=smem, size = 0x4, offset = 0x4, fixed_abs, tag = 'smem constant byte address 0x4 - core index']
  #allocation1 [shape = 'u32[144,128]{1,0:T(1,128)}', space=vmem, size = 0x12000, scoped, tag = 'internal scratch']
  %s0 = inlined_call_operand.vmem [shape: f32[2,8,362], index: 0, kind: input, shape index: {}]
  %s1 = inlined_call_operand.vmem [shape: f32[8,72], index: 1, kind: input, shape index: {}]
  %s2 = inlined_call_operand.vmem [shape: f32[8,1], index: 2, kind: input, shape index: {}]
  %s3 = inlined_call_operand.vmem [shape: f32[1,324], index: 3, kind: input, shape index: {}]
  %s4 = inlined_call_operand.vmem [shape: f32[8,72], index: 4, kind: input, shape index: {}]
  %s5 = inlined_call_operand.vmem [shape: f32[8,1], index: 5, kind: input, shape index: {}]
  %s6 = inlined_call_operand.vmem [shape: f32[2,8,286], index: 6, kind: output, shape index: {}]
  %s7 = sld [smem:[#allocation0]]
  $region57: #{conv_block_apply.1} parent=0
    _
  %s9 = ssub.s32 1, %s7
  %s10 = scalar_select 0, %s9, %s7
  loop: start=0, step=1, limit=4
  $region2: #{conv_block_apply.1} parent=0 // loop_pre_header
    _
  $region3: #{conv_block_apply.1} parent=0 // loop_header
    %s12 = sphi 0, %s16
    %p13 = scmp.ge.s32.totalorder %s12, 4
    %s22 = sphi 0, %s24
    %s25 = sphi 0, %s22
    %s26 = sphi 0, %s25
    %s42 = sphi 0, %s26
    %s46 = sphi 0, %s46
    %s48 = sphi 0, %s46
    %s49 = sphi 0, %s48
    %s63 = sphi 0, %s49
    %s67 = sphi 0, %s67
    %s69 = sphi 0, %s67
    %s70 = sphi 0, %s69
    %s84 = sphi 0, %s70
    %s88 = sphi 0, %s88
    %s90 = sphi 0, %s88
    %s91 = sphi 0, %s90
    %s105 = sphi 0, %s91
    %s109 = sphi 0, %s109
    %s111 = sphi 0, %s109
    %s112 = sphi 0, %s111
    %s126 = sphi 0, %s112
    %s130 = sphi 0, %s130
    %s132 = sphi 0, %s130
    %s133 = sphi 0, %s132
    %s147 = sphi 0, %s133
    %s153 = sphi 0, %s155
    %s156 = sphi 0, %s153
    %s157 = sphi 0, %s156
    %s173 = sphi 0, %s157
  $region4: #{conv_block_apply.1} parent=0 // loop_header_branch
    %15 = sbr.rel (%p13) target = $region8
  $region5: #{conv_block_apply.1} parent=0 // loop_body
    %s17 = ssub.s32 %s12, 1
    %s18 = ssub.s32 %s12, 2
    %s19 = sadd.s32 %s12, 1
    %s20 = ssub.s32 %s12, %s19
    %p21 = scmp.eq.s32.totalorder %s20, 0
    %s23 = sadd.s32 %s22, 1
    %s24 = scalar_select %p21, %s22, %s23
    %p27 = pneg %p21
    %p28 = scmp.eq.s32.totalorder %s12, 1
    %p29 = por %p27, %p28
    %p30 = scmp.ne.s32.totalorder %s22, %s25
    %p31 = scmp.eq.s32.totalorder %s12, 0
    %p32 = por %p30, %p31
    %p33 = scmp.ne.s32.totalorder %s22, %s25
    %p34 = scmp.eq.s32.totalorder %s17, 1
    %p35 = por %p33, %p34
    %p36 = scmp.ne.s32.totalorder %s25, %s26
    %p37 = scmp.eq.s32.totalorder %s17, 0
    %p38 = por %p36, %p37
    %p39 = scmp.ne.s32.totalorder %s25, %s26
    %p40 = scmp.eq.s32.totalorder %s18, 1
    %p41 = por %p39, %p40
    %p43 = scmp.ne.s32.totalorder %s26, %s42
    %p44 = scmp.eq.s32.totalorder %s18, 0
    %p45 = por %p43, %p44
    %s47 = sadd.s32 %s46, 1
    %p50 = scmp.eq.s32.totalorder %s12, 1
    %p51 = scmp.ne.s32.totalorder %s46, %s48
    %p52 = scmp.eq.s32.totalorder %s12, 0
    %p53 = por %p51, %p52
    %p54 = scmp.ne.s32.totalorder %s46, %s48
    %p55 = scmp.eq.s32.totalorder %s17, 1
    %p56 = por %p54, %p55
    %p57 = scmp.ne.s32.totalorder %s48, %s49
    %p58 = scmp.eq.s32.totalorder %s17, 0
    %p59 = por %p57, %p58
    %p60 = scmp.ne.s32.totalorder %s48, %s49
    %p61 = scmp.eq.s32.totalorder %s18, 1
    %p62 = por %p60, %p61
    %p64 = scmp.ne.s32.totalorder %s49, %s63
    %p65 = scmp.eq.s32.totalorder %s18, 0
    %p66 = por %p64, %p65
    %s68 = sadd.s32 %s67, 1
    %p71 = scmp.eq.s32.totalorder %s12, 1
    %p72 = scmp.ne.s32.totalorder %s67, %s69
    %p73 = scmp.eq.s32.totalorder %s12, 0
    %p74 = por %p72, %p73
    %p75 = scmp.ne.s32.totalorder %s67, %s69
    %p76 = scmp.eq.s32.totalorder %s17, 1
    %p77 = por %p75, %p76
    %p78 = scmp.ne.s32.totalorder %s69, %s70
    %p79 = scmp.eq.s32.totalorder %s17, 0
    %p80 = por %p78, %p79
    %p81 = scmp.ne.s32.totalorder %s69, %s70
    %p82 = scmp.eq.s32.totalorder %s18, 1
    %p83 = por %p81, %p82
    %p85 = scmp.ne.s32.totalorder %s70, %s84
    %p86 = scmp.eq.s32.totalorder %s18, 0
    %p87 = por %p85, %p86
    %s89 = sadd.s32 %s88, 1
    %p92 = scmp.eq.s32.totalorder %s12, 1
    %p93 = scmp.ne.s32.totalorder %s88, %s90
    %p94 = scmp.eq.s32.totalorder %s12, 0
    %p95 = por %p93, %p94
    %p96 = scmp.ne.s32.totalorder %s88, %s90
    %p97 = scmp.eq.s32.totalorder %s17, 1
    %p98 = por %p96, %p97
    %p99 = scmp.ne.s32.totalorder %s90, %s91
    %p100 = scmp.eq.s32.totalorder %s17, 0
    %p101 = por %p99, %p100
    %p102 = scmp.ne.s32.totalorder %s90, %s91
    %p103 = scmp.eq.s32.totalorder %s18, 1
    %p104 = por %p102, %p103
    %p106 = scmp.ne.s32.totalorder %s91, %s105
    %p107 = scmp.eq.s32.totalorder %s18, 0
    %p108 = por %p106, %p107
    %s110 = sadd.s32 %s109, 1
    %p113 = scmp.eq.s32.totalorder %s12, 1
    %p114 = scmp.ne.s32.totalorder %s109, %s111
    %p115 = scmp.eq.s32.totalorder %s12, 0
    %p116 = por %p114, %p115
    %p117 = scmp.ne.s32.totalorder %s109, %s111
    %p118 = scmp.eq.s32.totalorder %s17, 1
    %p119 = por %p117, %p118
    %p120 = scmp.ne.s32.totalorder %s111, %s112
    %p121 = scmp.eq.s32.totalorder %s17, 0
    %p122 = por %p120, %p121
    %p123 = scmp.ne.s32.totalorder %s111, %s112
    %p124 = scmp.eq.s32.totalorder %s18, 1
    %p125 = por %p123, %p124
    %p127 = scmp.ne.s32.totalorder %s112, %s126
    %p128 = scmp.eq.s32.totalorder %s18, 0
    %p129 = por %p127, %p128
    %s131 = sadd.s32 %s130, 1
    %p134 = scmp.eq.s32.totalorder %s12, 1
    %p135 = scmp.ne.s32.totalorder %s130, %s132
    %p136 = scmp.eq.s32.totalorder %s12, 0
    %p137 = por %p135, %p136
    %p138 = scmp.ne.s32.totalorder %s130, %s132
    %p139 = scmp.eq.s32.totalorder %s17, 1
    %p140 = por %p138, %p139
    %p141 = scmp.ne.s32.totalorder %s132, %s133
    %p142 = scmp.eq.s32.totalorder %s17, 0
    %p143 = por %p141, %p142
    %p144 = scmp.ne.s32.totalorder %s132, %s133
    %p145 = scmp.eq.s32.totalorder %s18, 1
    %p146 = por %p144, %p145
    %p148 = scmp.ne.s32.totalorder %s133, %s147
    %p149 = scmp.eq.s32.totalorder %s18, 0
    %p150 = por %p148, %p149
    %s151 = ssub.s32 %s12, %s19
    %p152 = scmp.eq.s32.totalorder %s151, 0
    %s154 = sadd.s32 %s153, 1
    %s155 = scalar_select %p152, %s153, %s154
    %p158 = pneg %p152
    %p159 = scmp.eq.s32.totalorder %s12, 1
    %p160 = por %p158, %p159
    %p161 = scmp.ne.s32.totalorder %s153, %s156
    %p162 = scmp.eq.s32.totalorder %s12, 0
    %p163 = por %p161, %p162
    %p164 = scmp.ne.s32.totalorder %s153, %s156
    %p165 = scmp.eq.s32.totalorder %s17, 1
    %p166 = por %p164, %p165
    %p167 = scmp.ne.s32.totalorder %s156, %s157
    %p168 = scmp.eq.s32.totalorder %s17, 0
    %p169 = por %p167, %p168
    %p170 = scmp.ne.s32.totalorder %s156, %s157
    %p171 = scmp.eq.s32.totalorder %s18, 1
    %p172 = por %p170, %p171
    %p174 = scmp.ne.s32.totalorder %s157, %s173
    %p175 = scmp.eq.s32.totalorder %s18, 0
    %p176 = por %p174, %p175
    %p177 = scmp.le.s32.totalorder 1, %s12
    %p178 = scmp.lt.s32.totalorder %s12, 3
    %p179 = pnand %p177, %p178
    %p180 = pneg %p179
    // Predicated region
    $region9: #{conv_block_apply.1} parent=5 // pred_check
      _
    $region10: #{conv_block_apply.1} parent=5 // pred_check_branch
      %182 = sbr.rel (%p179) target = $region12
    $region11: #{conv_block_apply.1} parent=5 // pred_region
      %s183 = ssub.s32 %s12, 1
      // Predicated region
      $region13: #{conv_block_apply.1} parent=11 // pred_check
        %p184 = pneg %p59
      $region14: #{conv_block_apply.1} parent=11 // pred_check_branch
        %186 = sbr.rel (%p184) target = $region16
      $region15: #{conv_block_apply.1} parent=11 // pred_region
        _
      $region16: #{conv_block_apply.1} parent=11 // pred_fallthru
        _
      // Predicated region
      $region17: #{conv_block_apply.1} parent=11 // pred_check
        %p187 = pneg %p80
      $region18: #{conv_block_apply.1} parent=11 // pred_check_branch
        %189 = sbr.rel (%p187) target = $region20
      $region19: #{conv_block_apply.1} parent=11 // pred_region
        _
      $region20: #{conv_block_apply.1} parent=11 // pred_fallthru
        _
      // Predicated region
      $region21: #{conv_block_apply.1} parent=11 // pred_check
        %p190 = pneg %p101
      $region22: #{conv_block_apply.1} parent=11 // pred_check_branch
        %192 = sbr.rel (%p190) target = $region24
      $region23: #{conv_block_apply.1} parent=11 // pred_region
        _
      $region24: #{conv_block_apply.1} parent=11 // pred_fallthru
        _
      // Predicated region
      $region25: #{conv_block_apply.1} parent=11 // pred_check
        %p193 = pneg %p122
      $region26: #{conv_block_apply.1} parent=11 // pred_check_branch
        %195 = sbr.rel (%p193) target = $region28
      $region27: #{conv_block_apply.1} parent=11 // pred_region
        _
      $region28: #{conv_block_apply.1} parent=11 // pred_fallthru
        _
      // Predicated region
      $region29: #{conv_block_apply.1} parent=11 // pred_check
        %p196 = pneg %p143
      $region30: #{conv_block_apply.1} parent=11 // pred_check_branch
        %198 = sbr.rel (%p196) target = $region32
      $region31: #{conv_block_apply.1} parent=11 // pred_region
        _
      $region32: #{conv_block_apply.1} parent=11 // pred_fallthru
        _
    $region12: #{conv_block_apply.1} parent=5 // pred_fallthru
      _
    %p199 = scmp.lt.s32.totalorder %s12, 2
    // Predicated region
    $region33: #{conv_block_apply.1} parent=5 // pred_check
      %p200 = pneg %p199
    $region34: #{conv_block_apply.1} parent=5 // pred_check_branch
      %202 = sbr.rel (%p200) target = $region36
    $region35: #{conv_block_apply.1} parent=5 // pred_region
      // Predicated region
      $region37: #{conv_block_apply.1} parent=35 // pred_check
        %p203 = pneg %p32
      $region38: #{conv_block_apply.1} parent=35 // pred_check_branch
        %205 = sbr.rel (%p203) target = $region40
      $region39: #{conv_block_apply.1} parent=35 // pred_region
        %p206 = scmp.lt.s32.totalorder %s12, 1
        %s207 = scalar_select %p206, %s12, 1
        %s208 = smul.addr %s207, 3
        %s209 = smul.addr %s208, 8
        %s210 = scalar_lea.vmem %s0, %s209
      $region40: #{conv_block_apply.1} parent=35 // pred_fallthru
        _
    $region36: #{conv_block_apply.1} parent=5 // pred_fallthru
      _
    %p211 = scmp.le.s32.totalorder 1, %s12
    %p212 = scmp.lt.s32.totalorder %s12, 3
    %p213 = pnand %p211, %p212
    %p214 = pneg %p213
    // Predicated region
    $region41: #{conv_block_apply.1} parent=5 // pred_check
      _
    $region42: #{conv_block_apply.1} parent=5 // pred_check_branch
      %216 = sbr.rel (%p213) target = $region44
    $region43: #{conv_block_apply.1} parent=5 // pred_region
      %s217 = ssub.s32 %s12, 1
      %p218 = scmp.lt.s32.totalorder %s17, 1
      %s219 = scalar_select %p218, %s17, 1
      %s220 = smul.addr %s219, 3
      %s221 = smul.addr %s220, 8
      %s222 = scalar_lea.vmem %s0, %s221
      %p223 = pneg %p38
      %p224 = pneg %p35
      %p225 = pneg %p59
      %p226 = pneg %p56
      %p227 = pneg %p80
      %p228 = pneg %p77
      %p229 = pneg %p101
      %p230 = pneg %p98
      %p231 = pneg %p122
      %p232 = pneg %p119
      %p233 = pneg %p143
      %p234 = pneg %p140
      %p235 = pneg %p169
      %p236 = pneg %p166
      %p237 = scmp.lt.s32.totalorder %s17, 1
      %s238 = scalar_select %p237, %s17, 1
      %s239 = smul.addr %s238, 3
      %s240 = smul.addr %s239, 8
      %s241 = scalar_lea.vmem %s6, %s240
      %p242 = scmp.lt.s32.totalorder %s17, 1
      %s243 = scalar_select %p242, %s17, 1
      %s244 = smul.addr %s243, 3
      %s245 = smul.addr %s244, 8
      %s246 = scalar_lea.vmem %s0, %s245
      %p247 = scmp.lt.s32.totalorder %s17, 1
      %s248 = scalar_select %p247, %s17, 1
      %s249 = smul.addr %s248, 3
      %s250 = smul.addr %s249, 8
      %s251 = scalar_lea.vmem %s6, %s250
      %v252 = vld [vmem:[%s246] sm:$0xff]
      %v253 = vld [vmem:[%s246 + $0x8] sm:$0xff]
      %v254 = vld [vmem:[%s246 + $0x10] sm:$0xff]
      %v255 = vld [vmem:[%s1] sm:$0xff]
      %259 = vrot.lane.b32.xlu0 %v252, 127
      %v260 = vpop.permute.xlu0 %259
      %261 = vrot.lane.b32.xlu0 %v253, 127
      %v262 = vpop.permute.xlu0 %261
      %263 = vrot.lane.b32.xlu0 %v254, 127
      %v264 = vpop.permute.xlu0 %263
      %vm265 = vcmask 1039360
      %v266 = vsel %vm265, %v260, %v262
      %v267 = vsel %vm265, %v262, %v264
      %271 = vrot.lane.b32.xlu0 %v252, 126
      %v272 = vpop.permute.xlu0 %271
      %273 = vrot.lane.b32.xlu0 %v253, 126
      %v274 = vpop.permute.xlu0 %273
      %275 = vrot.lane.b32.xlu0 %v254, 126
      %v276 = vpop.permute.xlu0 %275
      %vm277 = vcmask 1031168
      %v278 = vsel %vm277, %v272, %v274
      %v279 = vsel %vm277, %v274, %v276
      %283 = vrot.lane.b32.xlu0 %v252, 110
      %v284 = vpop.permute.xlu0 %283
      %285 = vrot.lane.b32.xlu0 %v253, 110
      %v286 = vpop.permute.xlu0 %285
      %287 = vrot.lane.b32.xlu0 %v254, 110
      %v288 = vpop.permute.xlu0 %287
      %vm289 = vcmask 900096
      %v290 = vsel %vm289, %v284, %v286
      %v291 = vsel %vm289, %v286, %v288
      %295 = vrot.lane.b32.xlu0 %v252, 109
      %v296 = vpop.permute.xlu0 %295
      %297 = vrot.lane.b32.xlu0 %v253, 109
      %v298 = vpop.permute.xlu0 %297
      %299 = vrot.lane.b32.xlu0 %v254, 109
      %v300 = vpop.permute.xlu0 %299
      %vm301 = vcmask 891904
      %v302 = vsel %vm301, %v296, %v298
      %v303 = vsel %vm301, %v298, %v300
      %307 = vrot.lane.b32.xlu0 %v252, 108
      %v308 = vpop.permute.xlu0 %307
      %309 = vrot.lane.b32.xlu0 %v253, 108
      %v310 = vpop.permute.xlu0 %309
      %311 = vrot.lane.b32.xlu0 %v254, 108
      %v312 = vpop.permute.xlu0 %311
      %vm313 = vcmask 883712
      %v314 = vsel %vm313, %v308, %v310
      %v315 = vsel %vm313, %v310, %v312
      %319 = vrot.lane.b32.xlu0 %v252, 92
      %v320 = vpop.permute.xlu0 %319
      %321 = vrot.lane.b32.xlu0 %v253, 92
      %v322 = vpop.permute.xlu0 %321
      %323 = vrot.lane.b32.xlu0 %v254, 92
      %v324 = vpop.permute.xlu0 %323
      %vm325 = vcmask 752640
      %v326 = vsel %vm325, %v320, %v322
      %v327 = vsel %vm325, %v322, %v324
      %331 = vrot.lane.b32.xlu0 %v252, 91
      %v332 = vpop.permute.xlu0 %331
      %333 = vrot.lane.b32.xlu0 %v253, 91
      %v334 = vpop.permute.xlu0 %333
      %335 = vrot.lane.b32.xlu0 %v254, 91
      %v336 = vpop.permute.xlu0 %335
      %vm337 = vcmask 744448
      %v338 = vsel %vm337, %v332, %v334
      %v339 = vsel %vm337, %v334, %v336
      %343 = vrot.lane.b32.xlu0 %v252, 90
      %v344 = vpop.permute.xlu0 %343
      %345 = vrot.lane.b32.xlu0 %v253, 90
      %v346 = vpop.permute.xlu0 %345
      %347 = vrot.lane.b32.xlu0 %v254, 90
      %v348 = vpop.permute.xlu0 %347
      %vm349 = vcmask 736256
      %v350 = vsel %vm349, %v344, %v346
      %v351 = vsel %vm349, %v346, %v348
      %v355 = vld [vmem:[%s2] sm:$0xff]
      %357 = vset.pattern.permute.xlu0 0
      %358 = vperm.xlu0 %357, %v355
      %v359 = vpop.permute.xlu0 %358
      %vm361 = vcmask 588800
      %v363 = vsel %vm361, %v255, 0
      %v365 = vand.u32 %v253, 4294901760
      %366 = vmatprep.subr.mxu0 %v365
      %v367 = vand.u32 %v252, 4294901760
      %368 = vmatpush1.msra.mxu0 %v367
      %v369 = vand.u32 %v267, 4294901760
      %370 = vmatprep.subr.mxu0 %v369
      %v371 = vand.u32 %v266, 4294901760
      %372 = vmatpush1.msra.mxu0 %v371
      %v373 = vand.u32 %v279, 4294901760
      %374 = vmatprep.subr.mxu0 %v373
      %v375 = vand.u32 %v278, 4294901760
      %376 = vmatpush1.msra.mxu0 %v375
      %v377 = vand.u32 %v291, 4294901760
      %378 = vmatprep.subr.mxu0 %v377
      %v379 = vand.u32 %v290, 4294901760
      %380 = vmatpush1.msra.mxu0 %v379
      %v381 = vand.u32 %v303, 4294901760
      %382 = vmatprep.subr.mxu0 %v381
      %v383 = vand.u32 %v302, 4294901760
      %384 = vmatpush1.msra.mxu0 %v383
      %v385 = vand.u32 %v315, 4294901760
      %386 = vmatprep.subr.mxu0 %v385
      %v387 = vand.u32 %v314, 4294901760
      %388 = vmatpush1.msra.mxu0 %v387
      %v389 = vand.u32 %v327, 4294901760
      %390 = vmatprep.subr.mxu0 %v389
      %v391 = vand.u32 %v326, 4294901760
      %392 = vmatpush1.msra.mxu0 %v391
      %v393 = vand.u32 %v339, 4294901760
      %394 = vmatprep.subr.mxu0 %v393
      %v395 = vand.u32 %v338, 4294901760
      %396 = vmatpush1.msra.mxu0 %v395
      %v397 = vand.u32 %v351, 4294901760
      %398 = vmatprep.subr.mxu0 %v397
      %v399 = vand.u32 %v350, 4294901760
      %400 = vmatpush1.msra.mxu0 %v399
      %401 = vmatprep.subr.mxu0 0.0
      %402 = vmatpush1.msra.mxu0 0.0
      %403 = vmatprep.subr.mxu0 0.0
      %404 = vmatpush1.msra.mxu0 0.0
      %405 = vmatprep.subr.mxu0 0.0
      %406 = vmatpush1.msra.mxu0 0.0
      %407 = vmatprep.subr.mxu0 0.0
      %408 = vmatpush1.msra.mxu0 0.0
      %409 = vmatprep.subr.mxu0 0.0
      %410 = vmatpush1.msra.mxu0 0.0
      %411 = vmatprep.subr.mxu0 0.0
      %412 = vmatpush1.msra.mxu0 0.0
      %413 = vmatprep.subr.mxu0 0.0
      %414 = vmatpush1.msra.mxu0 0.0
      %415 = vmatprep.subr.mxu0 0.0
      %416 = vmatpush1.msra.mxu0 0.0
      %417 = vmatprep.subr.mxu0 0.0
      %418 = vmatpush1.msra.mxu0 0.0
      %419 = vmatprep.subr.mxu0 0.0
      %420 = vmatpush1.msra.mxu0 0.0
      %421 = vmatprep.subr.mxu0 0.0
      %422 = vmatpush1.msra.mxu0 0.0
      %423 = vmatprep.subr.mxu0 0.0
      %424 = vmatpush1.msra.mxu0 0.0
      %425 = vmatprep.subr.mxu0 0.0
      %426 = vmatpush1.msra.mxu0 0.0
      %427 = vmatprep.subr.mxu0 0.0
      %428 = vmatpush1.msra.mxu0 0.0
      %429 = vmatprep.subr.mxu0 0.0
      %430 = vmatpush1.msra.mxu0 0.0
      %431 = vmatprep.subr.mxu0 0.0
      %432 = vmatpush1.msra.mxu0 0.0
      %433 = vmatprep.subr.mxu0 0.0
      %434 = vmatpush1.msra.mxu0 0.0
      %435 = vmatprep.subr.mxu0 0.0
      %436 = vmatpush1.msra.mxu0 0.0
      %437 = vmatprep.subr.mxu0 0.0
      %438 = vmatpush1.msra.mxu0 0.0
      %439 = vmatprep.subr.mxu0 0.0
      %440 = vmatpush1.msra.mxu0 0.0
      %441 = vmatprep.subr.mxu0 0.0
      %442 = vmatpush1.msra.mxu0 0.0
      %443 = vmatprep.subr.mxu0 0.0
      %444 = vmatpush1.msra.mxu0 0.0
      %445 = vmatprep.subr.mxu0 0.0
      %446 = vmatpush1.msra.mxu0 0.0
      %447 = vmatprep.mubr.f32.mxu0 0.0
      %v448 = vand.u32 %v363, 4294901760
      %v449 = vsub.f32 %v363, %v448
      %v450 = vand.u32 %v449, 4294901760
      %v451 = vsub.f32 %v449, %v450
      %v452 = vand.u32 %v451, 4294901760
      %453 = vmatmul.mubr.f32.gmra.mrb[0].mxu0 %v452
      %v454 = vpop.f32.mrb[0].mxu0
      %v455 = vadd.f32 %v359, %v454
      %v456 = vpop.f32.mrb[0].mxu0
      %v457 = vadd.f32 %v359, %v456
      %458 = vdwg.mxu0
      %v459 = vand.u32 %v253, 4294901760
      %v460 = vsub.f32 %v253, %v459
      %v461 = vand.u32 %v460, 4294901760
      %v462 = vsub.f32 %v460, %v461
      %v463 = vand.u32 %v462, 4294901760
      %464 = vmatprep.subr.mxu0 %v463
      %v465 = vand.u32 %v252, 4294901760
      %v466 = vsub.f32 %v252, %v465
      %v467 = vand.u32 %v466, 4294901760
      %v468 = vsub.f32 %v466, %v467
      %v469 = vand.u32 %v468, 4294901760
      %470 = vmatpush1.msra.mxu0 %v469
      %v471 = vand.u32 %v267, 4294901760
      %v472 = vsub.f32 %v267, %v471
      %v473 = vand.u32 %v472, 4294901760
      %v474 = vsub.f32 %v472, %v473
      %v475 = vand.u32 %v474, 4294901760
      %476 = vmatprep.subr.mxu0 %v475
      %v477 = vand.u32 %v266, 4294901760
      %v478 = vsub.f32 %v266, %v477
      %v479 = vand.u32 %v478, 4294901760
      %v480 = vsub.f32 %v478, %v479
      %v481 = vand.u32 %v480, 4294901760
      %482 = vmatpush1.msra.mxu0 %v481
      %v483 = vand.u32 %v279, 4294901760
      %v484 = vsub.f32 %v279, %v483
      %v485 = vand.u32 %v484, 4294901760
      %v486 = vsub.f32 %v484, %v485
      %v487 = vand.u32 %v486, 4294901760
      %488 = vmatprep.subr.mxu0 %v487
      %v489 = vand.u32 %v278, 4294901760
      %v490 = vsub.f32 %v278, %v489
      %v491 = vand.u32 %v490, 4294901760
      %v492 = vsub.f32 %v490, %v491
      %v493 = vand.u32 %v492, 4294901760
      %494 = vmatpush1.msra.mxu0 %v493
      %v495 = vand.u32 %v291, 4294901760
      %v496 = vsub.f32 %v291, %v495
      %v497 = vand.u32 %v496, 4294901760
      %v498 = vsub.f32 %v496, %v497
      %v499 = vand.u32 %v498, 4294901760
      %500 = vmatprep.subr.mxu0 %v499
      %v501 = vand.u32 %v290, 4294901760
      %v502 = vsub.f32 %v290, %v501
      %v503 = vand.u32 %v502, 4294901760
      %v504 = vsub.f32 %v502, %v503
      %v505 = vand.u32 %v504, 4294901760
      %506 = vmatpush1.msra.mxu0 %v505
      %v507 = vand.u32 %v303, 4294901760
      %v508 = vsub.f32 %v303, %v507
      %v509 = vand.u32 %v508, 4294901760
      %v510 = vsub.f32 %v508, %v509
      %v511 = vand.u32 %v510, 4294901760
      %512 = vmatprep.subr.mxu0 %v511
      %v513 = vand.u32 %v302, 4294901760
      %v514 = vsub.f32 %v302, %v513
      %v515 = vand.u32 %v514, 4294901760
      %v516 = vsub.f32 %v514, %v515
      %v517 = vand.u32 %v516, 4294901760
      %518 = vmatpush1.msra.mxu0 %v517
      %v519 = vand.u32 %v315, 4294901760
      %v520 = vsub.f32 %v315, %v519
      %v521 = vand.u32 %v520, 4294901760
      %v522 = vsub.f32 %v520, %v521
      %v523 = vand.u32 %v522, 4294901760
      %524 = vmatprep.subr.mxu0 %v523
      %v525 = vand.u32 %v314, 4294901760
      %v526 = vsub.f32 %v314, %v525
      %v527 = vand.u32 %v526, 4294901760
      %v528 = vsub.f32 %v526, %v527
      %v529 = vand.u32 %v528, 4294901760
      %530 = vmatpush1.msra.mxu0 %v529
      %v531 = vand.u32 %v327, 4294901760
      %v532 = vsub.f32 %v327, %v531
      %v533 = vand.u32 %v532, 4294901760
      %v534 = vsub.f32 %v532, %v533
      %v535 = vand.u32 %v534, 4294901760
      %536 = vmatprep.subr.mxu0 %v535
      %v537 = vand.u32 %v326, 4294901760
      %v538 = vsub.f32 %v326, %v537
      %v539 = vand.u32 %v538, 4294901760
      %v540 = vsub.f32 %v538, %v539
      %v541 = vand.u32 %v540, 4294901760
      %542 = vmatpush1.msra.mxu0 %v541
      %v543 = vand.u32 %v339, 4294901760
      %v544 = vsub.f32 %v339, %v543
      %v545 = vand.u32 %v544, 4294901760
      %v546 = vsub.f32 %v544, %v545
      %v547 = vand.u32 %v546, 4294901760
      %548 = vmatprep.subr.mxu0 %v547
      %v549 = vand.u32 %v338, 4294901760
      %v550 = vsub.f32 %v338, %v549
      %v551 = vand.u32 %v550, 4294901760
      %v552 = vsub.f32 %v550, %v551
      %v553 = vand.u32 %v552, 4294901760
      %554 = vmatpush1.msra.mxu0 %v553
      %v555 = vand.u32 %v351, 4294901760
      %v556 = vsub.f32 %v351, %v555
      %v557 = vand.u32 %v556, 4294901760
      %v558 = vsub.f32 %v556, %v557
      %v559 = vand.u32 %v558, 4294901760
      %560 = vmatprep.subr.mxu0 %v559
      %v561 = vand.u32 %v350, 4294901760
      %v562 = vsub.f32 %v350, %v561
      %v563 = vand.u32 %v562, 4294901760
      %v564 = vsub.f32 %v562, %v563
      %v565 = vand.u32 %v564, 4294901760
      %566 = vmatpush1.msra.mxu0 %v565
      %567 = vmatprep.subr.mxu0 0.0
      %568 = vmatpush1.msra.mxu0 0.0
      %569 = vmatprep.subr.mxu0 0.0
      %570 = vmatpush1.msra.mxu0 0.0
      %571 = vmatprep.subr.mxu0 0.0
      %572 = vmatpush1.msra.mxu0 0.0
      %573 = vmatprep.subr.mxu0 0.0
      %574 = vmatpush1.msra.mxu0 0.0
      %575 = vmatprep.subr.mxu0 0.0
      %576 = vmatpush1.msra.mxu0 0.0
      %577 = vmatprep.subr.mxu0 0.0
      %578 = vmatpush1.msra.mxu0 0.0
      %579 = vmatprep.subr.mxu0 0.0
      %580 = vmatpush1.msra.mxu0 0.0
      %581 = vmatprep.subr.mxu0 0.0
      %582 = vmatpush1.msra.mxu0 0.0
      %583 = vmatprep.subr.mxu0 0.0
      %584 = vmatpush1.msra.mxu0 0.0
      %585 = vmatprep.subr.mxu0 0.0
      %586 = vmatpush1.msra.mxu0 0.0
      %587 = vmatprep.subr.mxu0 0.0
      %588 = vmatpush1.msra.mxu0 0.0
      %589 = vmatprep.subr.mxu0 0.0
      %590 = vmatpush1.msra.mxu0 0.0
      %591 = vmatprep.subr.mxu0 0.0
      %592 = vmatpush1.msra.mxu0 0.0
      %593 = vmatprep.subr.mxu0 0.0
      %594 = vmatpush1.msra.mxu0 0.0
      %595 = vmatprep.subr.mxu0 0.0
      %596 = vmatpush1.msra.mxu0 0.0
      %597 = vmatprep.subr.mxu0 0.0
      %598 = vmatpush1.msra.mxu0 0.0
      %599 = vmatprep.subr.mxu0 0.0
      %600 = vmatpush1.msra.mxu0 0.0
      %601 = vmatprep.subr.mxu0 0.0
      %602 = vmatpush1.msra.mxu0 0.0
      %603 = vmatprep.subr.mxu0 0.0
      %604 = vmatpush1.msra.mxu0 0.0
      %605 = vmatprep.subr.mxu0 0.0
      %606 = vmatpush1.msra.mxu0 0.0
      %607 = vmatprep.subr.mxu0 0.0
      %608 = vmatpush1.msra.mxu0 0.0
      %609 = vmatprep.subr.mxu0 0.0
      %610 = vmatpush1.msra.mxu0 0.0
      %611 = vmatprep.subr.mxu0 0.0
      %612 = vmatpush1.msra.mxu0 0.0
      %613 = vmatprep.mubr.f32.mxu0 0.0
      %v614 = vand.u32 %v363, 4294901760
      %615 = vmatmul.mubr.f32.gmra.mrb[0].mxu0 %v614
      %v616 = vpop.f32.mrb[0].mxu0
      %v617 = vadd.f32 %v455, %v616
      %v618 = vpop.f32.mrb[0].mxu0
      %v619 = vadd.f32 %v457, %v618
      %620 = vdwg.mxu0
      %v621 = vand.u32 %v253, 4294901760
      %v622 = vsub.f32 %v253, %v621
      %623 = vmatprep.subr.mxu0 %v622
      %v624 = vand.u32 %v252, 4294901760
      %v625 = vsub.f32 %v252, %v624
      %626 = vmatpush1.msra.mxu0 %v625
      %v627 = vand.u32 %v267, 4294901760
      %v628 = vsub.f32 %v267, %v627
      %629 = vmatprep.subr.mxu0 %v628
      %v630 = vand.u32 %v266, 4294901760
      %v631 = vsub.f32 %v266, %v630
      %632 = vmatpush1.msra.mxu0 %v631
      %v633 = vand.u32 %v279, 4294901760
      %v634 = vsub.f32 %v279, %v633
      %635 = vmatprep.subr.mxu0 %v634
      %v636 = vand.u32 %v278, 4294901760
      %v637 = vsub.f32 %v278, %v636
      %638 = vmatpush1.msra.mxu0 %v637
      %v639 = vand.u32 %v291, 4294901760
      %v640 = vsub.f32 %v291, %v639
      %641 = vmatprep.subr.mxu0 %v640
      %v642 = vand.u32 %v290, 4294901760
      %v643 = vsub.f32 %v290, %v642
      %644 = vmatpush1.msra.mxu0 %v643
      %v645 = vand.u32 %v303, 4294901760
      %v646 = vsub.f32 %v303, %v645
      %647 = vmatprep.subr.mxu0 %v646
      %v648 = vand.u32 %v302, 4294901760
      %v649 = vsub.f32 %v302, %v648
      %650 = vmatpush1.msra.mxu0 %v649
      %v651 = vand.u32 %v315, 4294901760
      %v652 = vsub.f32 %v315, %v651
      %653 = vmatprep.subr.mxu0 %v652
      %v654 = vand.u32 %v314, 4294901760
      %v655 = vsub.f32 %v314, %v654
      %656 = vmatpush1.msra.mxu0 %v655
      %v657 = vand.u32 %v327, 4294901760
      %v658 = vsub.f32 %v327, %v657
      %659 = vmatprep.subr.mxu0 %v658
      %v660 = vand.u32 %v326, 4294901760
      %v661 = vsub.f32 %v326, %v660
      %662 = vmatpush1.msra.mxu0 %v661
      %v663 = vand.u32 %v339, 4294901760
      %v664 = vsub.f32 %v339, %v663
      %665 = vmatprep.subr.mxu0 %v664
      %v666 = vand.u32 %v338, 4294901760
      %v667 = vsub.f32 %v338, %v666
      %668 = vmatpush1.msra.mxu0 %v667
      %v669 = vand.u32 %v351, 4294901760
      %v670 = vsub.f32 %v351, %v669
      %671 = vmatprep.subr.mxu0 %v670
      %v672 = vand.u32 %v350, 4294901760
      %v673 = vsub.f32 %v350, %v672
      %674 = vmatpush1.msra.mxu0 %v673
      %675 = vmatprep.subr.mxu0 0.0
      %676 = vmatpush1.msra.mxu0 0.0
      %677 = vmatprep.subr.mxu0 0.0
      %678 = vmatpush1.msra.mxu0 0.0
      %679 = vmatprep.subr.mxu0 0.0
      %680 = vmatpush1.msra.mxu0 0.0
      %681 = vmatprep.subr.mxu0 0.0
      %682 = vmatpush1.msra.mxu0 0.0
      %683 = vmatprep.subr.mxu0 0.0
      %684 = vmatpush1.msra.mxu0 0.0
      %685 = vmatprep.subr.mxu0 0.0
      %686 = vmatpush1.msra.mxu0 0.0
      %687 = vmatprep.subr.mxu0 0.0
      %688 = vmatpush1.msra.mxu0 0.0
      %689 = vmatprep.subr.mxu0 0.0
      %690 = vmatpush1.msra.mxu0 0.0
      %691 = vmatprep.subr.mxu0 0.0
      %692 = vmatpush1.msra.mxu0 0.0
      %693 = vmatprep.subr.mxu0 0.0
      %694 = vmatpush1.msra.mxu0 0.0
      %695 = vmatprep.subr.mxu0 0.0
      %696 = vmatpush1.msra.mxu0 0.0
      %697 = vmatprep.subr.mxu0 0.0
      %698 = vmatpush1.msra.mxu0 0.0
      %699 = vmatprep.subr.mxu0 0.0
      %700 = vmatpush1.msra.mxu0 0.0
      %701 = vmatprep.subr.mxu0 0.0
      %702 = vmatpush1.msra.mxu0 0.0
      %703 = vmatprep.subr.mxu0 0.0
      %704 = vmatpush1.msra.mxu0 0.0
      %705 = vmatprep.subr.mxu0 0.0
      %706 = vmatpush1.msra.mxu0 0.0
      %707 = vmatprep.subr.mxu0 0.0
      %708 = vmatpush1.msra.mxu0 0.0
      %709 = vmatprep.subr.mxu0 0.0
      %710 = vmatpush1.msra.mxu0 0.0
      %711 = vmatprep.subr.mxu0 0.0
      %712 = vmatpush1.msra.mxu0 0.0
      %713 = vmatprep.subr.mxu0 0.0
      %714 = vmatpush1.msra.mxu0 0.0
      %715 = vmatprep.subr.mxu0 0.0
      %716 = vmatpush1.msra.mxu0 0.0
      %717 = vmatprep.subr.mxu0 0.0
      %718 = vmatpush1.msra.mxu0 0.0
      %719 = vmatprep.subr.mxu0 0.0
      %720 = vmatpush1.msra.mxu0 0.0
      %721 = vmatprep.mubr.f32.mxu0 0.0
      %v722 = vand.u32 %v363, 4294901760
      %v723 = vsub.f32 %v363, %v722
      %724 = vmatmul.mubr.f32.gmra.mrb[0].mxu0 %v723
      %v725 = vpop.f32.mrb[0].mxu0
      %v726 = vadd.f32 %v617, %v725
      %v727 = vpop.f32.mrb[0].mxu0
      %v728 = vadd.f32 %v619, %v727
      %729 = vdwg.mxu0
      %v730 = vand.u32 %v253, 4294901760
      %731 = vmatprep.subr.mxu0 %v730
      %v732 = vand.u32 %v252, 4294901760
      %733 = vmatpush1.msra.mxu0 %v732
      %v734 = vand.u32 %v267, 4294901760
      %735 = vmatprep.subr.mxu0 %v734
      %v736 = vand.u32 %v266, 4294901760
      %737 = vmatpush1.msra.mxu0 %v736
      %v738 = vand.u32 %v279, 4294901760
      %739 = vmatprep.subr.mxu0 %v738
      %v740 = vand.u32 %v278, 4294901760
      %741 = vmatpush1.msra.mxu0 %v740
      %v742 = vand.u32 %v291, 4294901760
      %743 = vmatprep.subr.mxu0 %v742
      %v744 = vand.u32 %v290, 4294901760
      %745 = vmatpush1.msra.mxu0 %v744
      %v746 = vand.u32 %v303, 4294901760
      %747 = vmatprep.subr.mxu0 %v746
      %v748 = vand.u32 %v302, 4294901760
      %749 = vmatpush1.msra.mxu0 %v748
      %v750 = vand.u32 %v315, 4294901760
      %751 = vmatprep.subr.mxu0 %v750
      %v752 = vand.u32 %v314, 4294901760
      %753 = vmatpush1.msra.mxu0 %v752
      %v754 = vand.u32 %v327, 4294901760
      %755 = vmatprep.subr.mxu0 %v754
      %v756 = vand.u32 %v326, 4294901760
      %757 = vmatpush1.msra.mxu0 %v756
      %v758 = vand.u32 %v339, 4294901760
      %759 = vmatprep.subr.mxu0 %v758
      %v760 = vand.u32 %v338, 4294901760
      %761 = vmatpush1.msra.mxu0 %v760
      %v762 = vand.u32 %v351, 4294901760
      %763 = vmatprep.subr.mxu0 %v762
      %v764 = vand.u32 %v350, 4294901760
      %765 = vmatpush1.msra.mxu0 %v764
      %766 = vmatprep.subr.mxu0 0.0
      %767 = vmatpush1.msra.mxu0 0.0
      %768 = vmatprep.subr.mxu0 0.0
      %769 = vmatpush1.msra.mxu0 0.0
      %770 = vmatprep.subr.mxu0 0.0
      %771 = vmatpush1.msra.mxu0 0.0
      %772 = vmatprep.subr.mxu0 0.0
      %773 = vmatpush1.msra.mxu0 0.0
      %774 = vmatprep.subr.mxu0 0.0
      %775 = vmatpush1.msra.mxu0 0.0
      %776 = vmatprep.subr.mxu0 0.0
      %777 = vmatpush1.msra.mxu0 0.0
      %778 = vmatprep.subr.mxu0 0.0
      %779 = vmatpush1.msra.mxu0 0.0
      %780 = vmatprep.subr.mxu0 0.0
      %781 = vmatpush1.msra.mxu0 0.0
      %782 = vmatprep.subr.mxu0 0.0
      %783 = vmatpush1.msra.mxu0 0.0
      %784 = vmatprep.subr.mxu0 0.0
      %785 = vmatpush1.msra.mxu0 0.0
      %786 = vmatprep.subr.mxu0 0.0
      %787 = vmatpush1.msra.mxu0 0.0
      %788 = vmatprep.subr.mxu0 0.0
      %789 = vmatpush1.msra.mxu0 0.0
      %790 = vmatprep.subr.mxu0 0.0
      %791 = vmatpush1.msra.mxu0 0.0
      %792 = vmatprep.subr.mxu0 0.0
      %793 = vmatpush1.msra.mxu0 0.0
      %794 = vmatprep.subr.mxu0 0.0
      %795 = vmatpush1.msra.mxu0 0.0
      %796 = vmatprep.subr.mxu0 0.0
      %797 = vmatpush1.msra.mxu0 0.0
      %798 = vmatprep.subr.mxu0 0.0
      %799 = vmatpush1.msra.mxu0 0.0
      %800 = vmatprep.subr.mxu0 0.0
      %801 = vmatpush1.msra.mxu0 0.0
      %802 = vmatprep.subr.mxu0 0.0
      %803 = vmatpush1.msra.mxu0 0.0
      %804 = vmatprep.subr.mxu0 0.0
      %805 = vmatpush1.msra.mxu0 0.0
      %806 = vmatprep.subr.mxu0 0.0
      %807 = vmatpush1.msra.mxu0 0.0
      %808 = vmatprep.subr.mxu0 0.0
      %809 = vmatpush1.msra.mxu0 0.0
      %810 = vmatprep.subr.mxu0 0.0
      %811 = vmatpush1.msra.mxu0 0.0
      %812 = vmatprep.mubr.f32.mxu0 0.0
      %v813 = vand.u32 %v363, 4294901760
      %v814 = vsub.f32 %v363, %v813
      %v815 = vand.u32 %v814, 4294901760
      %816 = vmatmul.mubr.f32.gmra.mrb[0].mxu0 %v815
      %v817 = vpop.f32.mrb[0].mxu0
      %v818 = vadd.f32 %v726, %v817
      %v819 = vpop.f32.mrb[0].mxu0
      %v820 = vadd.f32 %v728, %v819
      %821 = vdwg.mxu0
      %v822 = vand.u32 %v253, 4294901760
      %v823 = vsub.f32 %v253, %v822
      %v824 = vand.u32 %v823, 4294901760
      %825 = vmatprep.subr.mxu0 %v824
      %v826 = vand.u32 %v252, 4294901760
      %v827 = vsub.f32 %v252, %v826
      %v828 = vand.u32 %v827, 4294901760
      %829 = vmatpush1.msra.mxu0 %v828
      %v830 = vand.u32 %v267, 4294901760
      %v831 = vsub.f32 %v267, %v830
      %v832 = vand.u32 %v831, 4294901760
      %833 = vmatprep.subr.mxu0 %v832
      %v834 = vand.u32 %v266, 4294901760
      %v835 = vsub.f32 %v266, %v834
      %v836 = vand.u32 %v835, 4294901760
      %837 = vmatpush1.msra.mxu0 %v836
      %v838 = vand.u32 %v279, 4294901760
      %v839 = vsub.f32 %v279, %v838
      %v840 = vand.u32 %v839, 4294901760
      %841 = vmatprep.subr.mxu0 %v840
      %v842 = vand.u32 %v278, 4294901760
      %v843 = vsub.f32 %v278, %v842
      %v844 = vand.u32 %v843, 4294901760
      %845 = vmatpush1.msra.mxu0 %v844
      %v846 = vand.u32 %v291, 4294901760
      %v847 = vsub.f32 %v291, %v846
      %v848 = vand.u32 %v847, 4294901760
      %849 = vmatprep.subr.mxu0 %v848
      %v850 = vand.u32 %v290, 4294901760
      %v851 = vsub.f32 %v290, %v850
      %v852 = vand.u32 %v851, 4294901760
      %853 = vmatpush1.msra.mxu0 %v852
      %v854 = vand.u32 %v303, 4294901760
      %v855 = vsub.f32 %v303, %v854
      %v856 = vand.u32 %v855, 4294901760
      %857 = vmatprep.subr.mxu0 %v856
      %v858 = vand.u32 %v302, 4294901760
      %v859 = vsub.f32 %v302, %v858
      %v860 = vand.u32 %v859, 4294901760
      %861 = vmatpush1.msra.mxu0 %v860
      %v862 = vand.u32 %v315, 4294901760
      %v863 = vsub.f32 %v315, %v862
      %v864 = vand.u32 %v863, 4294901760
      %865 = vmatprep.subr.mxu0 %v864
      %v866 = vand.u32 %v314, 4294901760
      %v867 = vsub.f32 %v314, %v866
      %v868 = vand.u32 %v867, 4294901760
      %869 = vmatpush1.msra.mxu0 %v868
      %v870 = vand.u32 %v327, 4294901760
      %v871 = vsub.f32 %v327, %v870
      %v872 = vand.u32 %v871, 4294901760
      %873 = vmatprep.subr.mxu0 %v872
      %v874 = vand.u32 %v326, 4294901760
      %v875 = vsub.f32 %v326, %v874
      %v876 = vand.u32 %v875, 4294901760
      %877 = vmatpush1.msra.mxu0 %v876
      %v878 = vand.u32 %v339, 4294901760
      %v879 = vsub.f32 %v339, %v878
      %v880 = vand.u32 %v879, 4294901760
      %881 = vmatprep.subr.mxu0 %v880
      %v882 = vand.u32 %v338, 4294901760
      %v883 = vsub.f32 %v338, %v882
      %v884 = vand.u32 %v883, 4294901760
      %885 = vmatpush1.msra.mxu0 %v884
      %v886 = vand.u32 %v351, 4294901760
      %v887 = vsub.f32 %v351, %v886
      %v888 = vand.u32 %v887, 4294901760
      %889 = vmatprep.subr.mxu0 %v888
      %v890 = vand.u32 %v350, 4294901760
      %v891 = vsub.f32 %v350, %v890
      %v892 = vand.u32 %v891, 4294901760
      %893 = vmatpush1.msra.mxu0 %v892
      %894 = vmatprep.subr.mxu0 0.0
      %895 = vmatpush1.msra.mxu0 0.0
      %896 = vmatprep.subr.mxu0 0.0
      %897 = vmatpush1.msra.mxu0 0.0
      %898 = vmatprep.subr.mxu0 0.0
      %899 = vmatpush1.msra.mxu0 0.0
      %900 = vmatprep.subr.mxu0 0.0
      %901 = vmatpush1.msra.mxu0 0.0
      %902 = vmatprep.subr.mxu0 0.0
      %903 = vmatpush1.msra.mxu0 0.0
      %904 = vmatprep.subr.mxu0 0.0
      %905 = vmatpush1.msra.mxu0 0.0
      %906 = vmatprep.subr.mxu0 0.0
      %907 = vmatpush1.msra.mxu0 0.0
      %908 = vmatprep.subr.mxu0 0.0
      %909 = vmatpush1.msra.mxu0 0.0
      %910 = vmatprep.subr.mxu0 0.0
      %911 = vmatpush1.msra.mxu0 0.0
      %912 = vmatprep.subr.mxu0 0.0
      %913 = vmatpush1.msra.mxu0 0.0
      %914 = vmatprep.subr.mxu0 0.0
      %915 = vmatpush1.msra.mxu0 0.0
      %916 = vmatprep.subr.mxu0 0.0
      %917 = vmatpush1.msra.mxu0 0.0
      %918 = vmatprep.subr.mxu0 0.0
      %919 = vmatpush1.msra.mxu0 0.0
      %920 = vmatprep.subr.mxu0 0.0
      %921 = vmatpush1.msra.mxu0 0.0
      %922 = vmatprep.subr.mxu0 0.0
      %923 = vmatpush1.msra.mxu0 0.0
      %924 = vmatprep.subr.mxu0 0.0
      %925 = vmatpush1.msra.mxu0 0.0
      %926 = vmatprep.subr.mxu0 0.0
      %927 = vmatpush1.msra.mxu0 0.0
      %928 = vmatprep.subr.mxu0 0.0
      %929 = vmatpush1.msra.mxu0 0.0
      %930 = vmatprep.subr.mxu0 0.0
      %931 = vmatpush1.msra.mxu0 0.0
      %932 = vmatprep.subr.mxu0 0.0
      %933 = vmatpush1.msra.mxu0 0.0
      %934 = vmatprep.subr.mxu0 0.0
      %935 = vmatpush1.msra.mxu0 0.0
      %936 = vmatprep.subr.mxu0 0.0
      %937 = vmatpush1.msra.mxu0 0.0
      %938 = vmatprep.subr.mxu0 0.0
      %939 = vmatpush1.msra.mxu0 0.0
      %940 = vmatprep.mubr.f32.mxu0 0.0
      %v941 = vand.u32 %v363, 4294901760
      %942 = vmatmul.mubr.f32.gmra.mrb[0].mxu0 %v941
      %v943 = vpop.f32.mrb[0].mxu0
      %v944 = vadd.f32 %v818, %v943
      %v945 = vpop.f32.mrb[0].mxu0
      %v946 = vadd.f32 %v820, %v945
      %947 = vdwg.mxu0
      %v948 = vand.u32 %v253, 4294901760
      %949 = vmatprep.subr.mxu0 %v948
      %v950 = vand.u32 %v252, 4294901760
      %951 = vmatpush1.msra.mxu0 %v950
      %v952 = vand.u32 %v267, 4294901760
      %953 = vmatprep.subr.mxu0 %v952
      %v954 = vand.u32 %v266, 4294901760
      %955 = vmatpush1.msra.mxu0 %v954
      %v956 = vand.u32 %v279, 4294901760
      %957 = vmatprep.subr.mxu0 %v956
      %v958 = vand.u32 %v278, 4294901760
      %959 = vmatpush1.msra.mxu0 %v958
      %v960 = vand.u32 %v291, 4294901760
      %961 = vmatprep.subr.mxu0 %v960
      %v962 = vand.u32 %v290, 4294901760
      %963 = vmatpush1.msra.mxu0 %v962
      %v964 = vand.u32 %v303, 4294901760
      %965 = vmatprep.subr.mxu0 %v964
      %v966 = vand.u32 %v302, 4294901760
      %967 = vmatpush1.msra.mxu0 %v966
      %v968 = vand.u32 %v315, 4294901760
      %969 = vmatprep.subr.mxu0 %v968
      %v970 = vand.u32 %v314, 4294901760
      %971 = vmatpush1.msra.mxu0 %v970
      %v972 = vand.u32 %v327, 4294901760
      %973 = vmatprep.subr.mxu0 %v972
      %v974 = vand.u32 %v326, 4294901760
      %975 = vmatpush1.msra.mxu0 %v974
      %v976 = vand.u32 %v339, 4294901760
      %977 = vmatprep.subr.mxu0 %v976
      %v978 = vand.u32 %v338, 4294901760
      %979 = vmatpush1.msra.mxu0 %v978
      %v980 = vand.u32 %v351, 4294901760
      %981 = vmatprep.subr.mxu0 %v980
      %v982 = vand.u32 %v350, 4294901760
      %983 = vmatpush1.msra.mxu0 %v982
      %984 = vmatprep.subr.mxu0 0.0
      %985 = vmatpush1.msra.mxu0 0.0
      %986 = vmatprep.subr.mxu0 0.0
      %987 = vmatpush1.msra.mxu0 0.0
      %988 = vmatprep.subr.mxu0 0.0
      %989 = vmatpush1.msra.mxu0 0.0
      %990 = vmatprep.subr.mxu0 0.0
      %991 = vmatpush1.msra.mxu0 0.0
      %992 = vmatprep.subr.mxu0 0.0
      %993 = vmatpush1.msra.mxu0 0.0
      %994 = vmatprep.subr.mxu0 0.0
      %995 = vmatpush1.msra.mxu0 0.0
      %996 = vmatprep.subr.mxu0 0.0
      %997 = vmatpush1.msra.mxu0 0.0
      %998 = vmatprep.subr.mxu0 0.0
      %999 = vmatpush1.msra.mxu0 0.0
      %1000 = vmatprep.subr.mxu0 0.0
      %1001 = vmatpush1.msra.mxu0 0.0
      %1002 = vmatprep.subr.mxu0 0.0
      %1003 = vmatpush1.msra.mxu0 0.0
      %1004 = vmatprep.subr.mxu0 0.0
      %1005 = vmatpush1.msra.mxu0 0.0
      %1006 = vmatprep.subr.mxu0 0.0
      %1007 = vmatpush1.msra.mxu0 0.0
      %1008 = vmatprep.subr.mxu0 0.0
      %1009 = vmatpush1.msra.mxu0 0.0
      %1010 = vmatprep.subr.mxu0 0.0
      %1011 = vmatpush1.msra.mxu0 0.0
      %1012 = vmatprep.subr.mxu0 0.0
      %1013 = vmatpush1.msra.mxu0 0.0
      %1014 = vmatprep.subr.mxu0 0.0
      %1015 = vmatpush1.msra.mxu0 0.0
      %1016 = vmatprep.subr.mxu0 0.0
      %1017 = vmatpush1.msra.mxu0 0.0
      %1018 = vmatprep.subr.mxu0 0.0
      %1019 = vmatpush1.msra.mxu0 0.0
      %1020 = vmatprep.subr.mxu0 0.0
      %1021 = vmatpush1.msra.mxu0 0.0
      %1022 = vmatprep.subr.mxu0 0.0
      %1023 = vmatpush1.msra.mxu0 0.0
      %1024 = vmatprep.subr.mxu0 0.0
      %1025 = vmatpush1.msra.mxu0 0.0
      %1026 = vmatprep.subr.mxu0 0.0
      %1027 = vmatpush1.msra.mxu0 0.0
      %1028 = vmatprep.subr.mxu0 0.0
      %1029 = vmatpush1.msra.mxu0 0.0
      %1030 = vmatprep.mubr.f32.mxu0 0.0
      %v1031 = vand.u32 %v363, 4294901760
      %1032 = vmatmul.mubr.f32.gmra.mrb[0].mxu0 %v1031
      %v1033 = vpop.f32.mrb[0].mxu0
      %v1034 = vadd.f32 %v944, %v1033
      %v1035 = vpop.f32.mrb[0].mxu0
      %v1036 = vadd.f32 %v946, %v1035
      %1037 = vdwg.mxu0
      %1038 = vmatprep.subr.mxu0 0.0
      %v1039 = vand.u32 %v254, 4294901760
      %1040 = vmatpush1.msra.mxu0 %v1039
      %1041 = vmatprep.subr.mxu0 0.0
      %v1042 = vand.u32 %v264, 4294901760
      %1043 = vmatpush1.msra.mxu0 %v1042
      %1044 = vmatprep.subr.mxu0 0.0
      %v1045 = vand.u32 %v276, 4294901760
      %1046 = vmatpush1.msra.mxu0 %v1045
      %1047 = vmatprep.subr.mxu0 0.0
      %v1048 = vand.u32 %v288, 4294901760
      %1049 = vmatpush1.msra.mxu0 %v1048
      %1050 = vmatprep.subr.mxu0 0.0
      %v1051 = vand.u32 %v300, 4294901760
      %1052 = vmatpush1.msra.mxu0 %v1051
      %1053 = vmatprep.subr.mxu0 0.0
      %v1054 = vand.u32 %v312, 4294901760
      %1055 = vmatpush1.msra.mxu0 %v1054
      %1056 = vmatprep.subr.mxu0 0.0
      %v1057 = vand.u32 %v324, 4294901760
      %1058 = vmatpush1.msra.mxu0 %v1057
      %1059 = vmatprep.subr.mxu0 0.0
      %v1060 = vand.u32 %v336, 4294901760
      %1061 = vmatpush1.msra.mxu0 %v1060
      %1062 = vmatprep.subr.mxu0 0.0
      %v1063 = vand.u32 %v348, 4294901760
      %1064 = vmatpush1.msra.mxu0 %v1063
      %1065 = vmatprep.subr.mxu0 0.0
      %1066 = vmatpush1.msra.mxu0 0.0
      %1067 = vmatprep.subr.mxu0 0.0
      %1068 = vmatpush1.msra.mxu0 0.0
      %1069 = vmatprep.subr.mxu0 0.0
      %1070 = vmatpush1.msra.mxu0 0.0
      %1071 = vmatprep.subr.mxu0 0.0
      %1072 = vmatpush1.msra.mxu0 0.0
      %1073 = vmatprep.subr.mxu0 0.0
      %1074 = vmatpush1.msra.mxu0 0.0
      %1075 = vmatprep.subr.mxu0 0.0
      %1076 = vmatpush1.msra.mxu0 0.0
      %1077 = vmatprep.subr.mxu0 0.0
      %1078 = vmatpush1.msra.mxu0 0.0
      %1079 = vmatprep.subr.mxu0 0.0
      %1080 = vmatpush1.msra.mxu0 0.0
      %1081 = vmatprep.subr.mxu0 0.0
      %1082 = vmatpush1.msra.mxu0 0.0
      %1083 = vmatprep.subr.mxu0 0.0
      %1084 = vmatpush1.msra.mxu0 0.0
      %1085 = vmatprep.subr.mxu0 0.0
      %1086 = vmatpush1.msra.mxu0 0.0
      %1087 = vmatprep.subr.mxu0 0.0
      %1088 = vmatpush1.msra.mxu0 0.0
      %1089 = vmatprep.subr.mxu0 0.0
      %1090 = vmatpush1.msra.mxu0 0.0
      %1091 = vmatprep.subr.mxu0 0.0
      %1092 = vmatpush1.msra.mxu0 0.0
      %1093 = vmatprep.subr.mxu0 0.0
      %1094 = vmatpush1.msra.mxu0 0.0
      %1095 = vmatprep.subr.mxu0 0.0
      %1096 = vmatpush1.msra.mxu0 0.0
      %1097 = vmatprep.subr.mxu0 0.0
      %1098 = vmatpush1.msra.mxu0 0.0
      %1099 = vmatprep.subr.mxu0 0.0
      %1100 = vmatpush1.msra.mxu0 0.0
      %1101 = vmatprep.subr.mxu0 0.0
      %1102 = vmatpush1.msra.mxu0 0.0
      %1103 = vmatprep.subr.mxu0 0.0
      %1104 = vmatpush1.msra.mxu0 0.0
      %1105 = vmatprep.subr.mxu0 0.0
      %1106 = vmatpush1.msra.mxu0 0.0
      %1107 = vmatprep.subr.mxu0 0.0
      %1108 = vmatpush1.msra.mxu0 0.0
      %1109 = vmatprep.subr.mxu0 0.0
      %1110 = vmatpush1.msra.mxu0 0.0
      %1111 = vmatprep.mubr.f32.mxu0 0.0
      %v1112 = vand.u32 %v363, 4294901760
      %v1113 = vsub.f32 %v363, %v1112
      %v1114 = vand.u32 %v1113, 4294901760
      %v1115 = vsub.f32 %v1113, %v1114
      %v1116 = vand.u32 %v1115, 4294901760
      %1117 = vmatmul.mubr.f32.gmra.mrb[0].mxu0 %v1116
      %v1118 = vpop.f32.mrb[0].mxu0
      %v1119 = vadd.f32 %v359, %v1118
      %v1120 = vpop.f32.mrb[0].mxu0
      %1121 = vdwg.mxu0
      %1122 = vmatprep.subr.mxu0 0.0
      %v1123 = vand.u32 %v254, 4294901760
      %v1124 = vsub.f32 %v254, %v1123
      %v1125 = vand.u32 %v1124, 4294901760
      %v1126 = vsub.f32 %v1124, %v1125
      %v1127 = vand.u32 %v1126, 4294901760
      %1128 = vmatpush1.msra.mxu0 %v1127
      %1129 = vmatprep.subr.mxu0 0.0
      %v1130 = vand.u32 %v264, 4294901760
      %v1131 = vsub.f32 %v264, %v1130
      %v1132 = vand.u32 %v1131, 4294901760
      %v1133 = vsub.f32 %v1131, %v1132
      %v1134 = vand.u32 %v1133, 4294901760
      %1135 = vmatpush1.msra.mxu0 %v1134
      %1136 = vmatprep.subr.mxu0 0.0
      %v1137 = vand.u32 %v276, 4294901760
      %v1138 = vsub.f32 %v276, %v1137
      %v1139 = vand.u32 %v1138, 4294901760
      %v1140 = vsub.f32 %v1138, %v1139
      %v1141 = vand.u32 %v1140, 4294901760
      %1142 = vmatpush1.msra.mxu0 %v1141
      %1143 = vmatprep.subr.mxu0 0.0
      %v1144 = vand.u32 %v288, 4294901760
      %v1145 = vsub.f32 %v288, %v1144
      %v1146 = vand.u32 %v1145, 4294901760
      %v1147 = vsub.f32 %v1145, %v1146
      %v1148 = vand.u32 %v1147, 4294901760
      %1149 = vmatpush1.msra.mxu0 %v1148
      %1150 = vmatprep.subr.mxu0 0.0
      %v1151 = vand.u32 %v300, 4294901760
      %v1152 = vsub.f32 %v300, %v1151
      %v1153 = vand.u32 %v1152, 4294901760
      %v1154 = vsub.f32 %v1152, %v1153
      %v1155 = vand.u32 %v1154, 4294901760
      %1156 = vmatpush1.msra.mxu0 %v1155
      %1157 = vmatprep.subr.mxu0 0.0
      %v1158 = vand.u32 %v312, 4294901760
      %v1159 = vsub.f32 %v312, %v1158
      %v1160 = vand.u32 %v1159, 4294901760
      %v1161 = vsub.f32 %v1159, %v1160
      %v1162 = vand.u32 %v1161, 4294901760
      %1163 = vmatpush1.msra.mxu0 %v1162
      %1164 = vmatprep.subr.mxu0 0.0
      %v1165 = vand.u32 %v324, 4294901760
      %v1166 = vsub.f32 %v324, %v1165
      %v1167 = vand.u32 %v1166, 4294901760
      %v1168 = vsub.f32 %v1166, %v1167
      %v1169 = vand.u32 %v1168, 4294901760
      %1170 = vmatpush1.msra.mxu0 %v1169
      %1171 = vmatprep.subr.mxu0 0.0
      %v1172 = vand.u32 %v336, 4294901760
      %v1173 = vsub.f32 %v336, %v1172
      %v1174 = vand.u32 %v1173, 4294901760
      %v1175 = vsub.f32 %v1173, %v1174
      %v1176 = vand.u32 %v1175, 4294901760
      %1177 = vmatpush1.msra.mxu0 %v1176
      %1178 = vmatprep.subr.mxu0 0.0
      %v1179 = vand.u32 %v348, 4294901760
      %v1180 = vsub.f32 %v348, %v1179
      %v1181 = vand.u32 %v1180, 4294901760
      %v1182 = vsub.f32 %v1180, %v1181
      %v1183 = vand.u32 %v1182, 4294901760
      %1184 = vmatpush1.msra.mxu0 %v1183
      %1185 = vmatprep.subr.mxu0 0.0
      %1186 = vmatpush1.msra.mxu0 0.0
      %1187 = vmatprep.subr.mxu0 0.0
      %1188 = vmatpush1.msra.mxu0 0.0
      %1189 = vmatprep.subr.mxu0 0.0
      %1190 = vmatpush1.msra.mxu0 0.0
      %1191 = vmatprep.subr.mxu0 0.0
      %1192 = vmatpush1.msra.mxu0 0.0
      %1193 = vmatprep.subr.mxu0 0.0
      %1194 = vmatpush1.msra.mxu0 0.0
      %1195 = vmatprep.subr.mxu0 0.0
      %1196 = vmatpush1.msra.mxu0 0.0
      %1197 = vmatprep.subr.mxu0 0.0
      %1198 = vmatpush1.msra.mxu0 0.0
      %1199 = vmatprep.subr.mxu0 0.0
      %1200 = vmatpush1.msra.mxu0 0.0
      %1201 = vmatprep.subr.mxu0 0.0
      %1202 = vmatpush1.msra.mxu0 0.0
      %1203 = vmatprep.subr.mxu0 0.0
      %1204 = vmatpush1.msra.mxu0 0.0
      %1205 = vmatprep.subr.mxu0 0.0
      %1206 = vmatpush1.msra.mxu0 0.0
      %1207 = vmatprep.subr.mxu0 0.0
      %1208 = vmatpush1.msra.mxu0 0.0
      %1209 = vmatprep.subr.mxu0 0.0
      %1210 = vmatpush1.msra.mxu0 0.0
      %1211 = vmatprep.subr.mxu0 0.0
      %1212 = vmatpush1.msra.mxu0 0.0
      %1213 = vmatprep.subr.mxu0 0.0
      %1214 = vmatpush1.msra.mxu0 0.0
      %1215 = vmatprep.subr.mxu0 0.0
      %1216 = vmatpush1.msra.mxu0 0.0
      %1217 = vmatprep.subr.mxu0 0.0
      %1218 = vmatpush1.msra.mxu0 0.0
      %1219 = vmatprep.subr.mxu0 0.0
      %1220 = vmatpush1.msra.mxu0 0.0
      %1221 = vmatprep.subr.mxu0 0.0
      %1222 = vmatpush1.msra.mxu0 0.0
      %1223 = vmatprep.subr.mxu0 0.0
      %1224 = vmatpush1.msra.mxu0 0.0
      %1225 = vmatprep.subr.mxu0 0.0
      %1226 = vmatpush1.msra.mxu0 0.0
      %1227 = vmatprep.subr.mxu0 0.0
      %1228 = vmatpush1.msra.mxu0 0.0
      %1229 = vmatprep.subr.mxu0 0.0
      %1230 = vmatpush1.msra.mxu0 0.0
      %1231 = vmatprep.mubr.f32.mxu0 0.0
      %v1232 = vand.u32 %v363, 4294901760
      %1233 = vmatmul.mubr.f32.gmra.mrb[0].mxu0 %v1232
      %v1234 = vpop.f32.mrb[0].mxu0
      %v1235 = vadd.f32 %v1119, %v1234
      %v1236 = vpop.f32.mrb[0].mxu0
      %1237 = vdwg.mxu0
      %1238 = vmatprep.subr.mxu0 0.0
      %v1239 = vand.u32 %v254, 4294901760
      %v1240 = vsub.f32 %v254, %v1239
      %1241 = vmatpush1.msra.mxu0 %v1240
      %1242 = vmatprep.subr.mxu0 0.0
      %v1243 = vand.u32 %v264, 4294901760
      %v1244 = vsub.f32 %v264, %v1243
      %1245 = vmatpush1.msra.mxu0 %v1244
      %1246 = vmatprep.subr.mxu0 0.0
      %v1247 = vand.u32 %v276, 4294901760
      %v1248 = vsub.f32 %v276, %v1247
      %1249 = vmatpush1.msra.mxu0 %v1248
      %1250 = vmatprep.subr.mxu0 0.0
      %v1251 = vand.u32 %v288, 4294901760
      %v1252 = vsub.f32 %v288, %v1251
      %1253 = vmatpush1.msra.mxu0 %v1252
      %1254 = vmatprep.subr.mxu0 0.0
      %v1255 = vand.u32 %v300, 4294901760
      %v1256 = vsub.f32 %v300, %v1255
      %1257 = vmatpush1.msra.mxu0 %v1256
      %1258 = vmatprep.subr.mxu0 0.0
      %v1259 = vand.u32 %v312, 4294901760
      %v1260 = vsub.f32 %v312, %v1259
      %1261 = vmatpush1.msra.mxu0 %v1260
      %1262 = vmatprep.subr.mxu0 0.0
      %v1263 = vand.u32 %v324, 4294901760
      %v1264 = vsub.f32 %v324, %v1263
      %1265 = vmatpush1.msra.mxu0 %v1264
      %1266 = vmatprep.subr.mxu0 0.0
      %v1267 = vand.u32 %v336, 4294901760
      %v1268 = vsub.f32 %v336, %v1267
      %1269 = vmatpush1.msra.mxu0 %v1268
      %1270 = vmatprep.subr.mxu0 0.0
      %v1271 = vand.u32 %v348, 4294901760
      %v1272 = vsub.f32 %v348, %v1271
      %1273 = vmatpush1.msra.mxu0 %v1272
      %1274 = vmatprep.subr.mxu0 0.0
      %1275 = vmatpush1.msra.mxu0 0.0
      %1276 = vmatprep.subr.mxu0 0.0
      %1277 = vmatpush1.msra.mxu0 0.0
      %1278 = vmatprep.subr.mxu0 0.0
      %1279 = vmatpush1.msra.mxu0 0.0
      %1280 = vmatprep.subr.mxu0 0.0
      %1281 = vmatpush1.msra.mxu0 0.0
      %1282 = vmatprep.subr.mxu0 0.0
      %1283 = vmatpush1.msra.mxu0 0.0
      %1284 = vmatprep.subr.mxu0 0.0
      %1285 = vmatpush1.msra.mxu0 0.0
      %1286 = vmatprep.subr.mxu0 0.0
      %1287 = vmatpush1.msra.mxu0 0.0
      %1288 = vmatprep.subr.mxu0 0.0
      %1289 = vmatpush1.msra.mxu0 0.0
      %1290 = vmatprep.subr.mxu0 0.0
      %1291 = vmatpush1.msra.mxu0 0.0
      %1292 = vmatprep.subr.mxu0 0.0
      %1293 = vmatpush1.msra.mxu0 0.0
      %1294 = vmatprep.subr.mxu0 0.0
      %1295 = vmatpush1.msra.mxu0 0.0
      %1296 = vmatprep.subr.mxu0 0.0
      %1297 = vmatpush1.msra.mxu0 0.0
      %1298 = vmatprep.subr.mxu0 0.0
      %1299 = vmatpush1.msra.mxu0 0.0
      %1300 = vmatprep.subr.mxu0 0.0
      %1301 = vmatpush1.msra.mxu0 0.0
      %1302 = vmatprep.subr.mxu0 0.0
      %1303 = vmatpush1.msra.mxu0 0.0
      %1304 = vmatprep.subr.mxu0 0.0
      %1305 = vmatpush1.msra.mxu0 0.0
      %1306 = vmatprep.subr.mxu0 0.0
      %1307 = vmatpush1.msra.mxu0 0.0
      %1308 = vmatprep.subr.mxu0 0.0
      %1309 = vmatpush1.msra.mxu0 0.0
      %1310 = vmatprep.subr.mxu0 0.0
      %1311 = vmatpush1.msra.mxu0 0.0
      %1312 = vmatprep.subr.mxu0 0.0
      %1313 = vmatpush1.msra.mxu0 0.0
      %1314 = vmatprep.subr.mxu0 0.0
      %1315 = vmatpush1.msra.mxu0 0.0
      %1316 = vmatprep.subr.mxu0 0.0
      %1317 = vmatpush1.msra.mxu0 0.0
      %1318 = vmatprep.subr.mxu0 0.0
      %1319 = vmatpush1.msra.mxu0 0.0
      %1320 = vmatprep.mubr.f32.mxu0 0.0
      %v1321 = vand.u32 %v363, 4294901760
      %v1322 = vsub.f32 %v363, %v1321
      %1323 = vmatmul.mubr.f32.gmra.mrb[0].mxu0 %v1322
      %v1324 = vpop.f32.mrb[0].mxu0
      %v1325 = vadd.f32 %v1235, %v1324
      %v1326 = vpop.f32.mrb[0].mxu0
      %1327 = vdwg.mxu0
      %1328 = vmatprep.subr.mxu0 0.0
      %v1329 = vand.u32 %v254, 4294901760
      %1330 = vmatpush1.msra.mxu0 %v1329
      %1331 = vmatprep.subr.mxu0 0.0
      %v1332 = vand.u32 %v264, 4294901760
      %1333 = vmatpush1.msra.mxu0 %v1332
      %1334 = vmatprep.subr.mxu0 0.0
      %v1335 = vand.u32 %v276, 4294901760
      %1336 = vmatpush1.msra.mxu0 %v1335
      %1337 = vmatprep.subr.mxu0 0.0
      %v1338 = vand.u32 %v288, 4294901760
      %1339 = vmatpush1.msra.mxu0 %v1338
      %1340 = vmatprep.subr.mxu0 0.0
      %v1341 = vand.u32 %v300, 4294901760
      %1342 = vmatpush1.msra.mxu0 %v1341
      %1343 = vmatprep.subr.mxu0 0.0
      %v1344 = vand.u32 %v312, 4294901760
      %1345 = vmatpush1.msra.mxu0 %v1344
      %1346 = vmatprep.subr.mxu0 0.0
      %v1347 = vand.u32 %v324, 4294901760
      %1348 = vmatpush1.msra.mxu0 %v1347
      %1349 = vmatprep.subr.mxu0 0.0
      %v1350 = vand.u32 %v336, 4294901760
      %1351 = vmatpush1.msra.mxu0 %v1350
      %1352 = vmatprep.subr.mxu0 0.0
      %v1353 = vand.u32 %v348, 4294901760
      %1354 = vmatpush1.msra.mxu0 %v1353
      %1355 = vmatprep.subr.mxu0 0.0
      %1356 = vmatpush1.msra.mxu0 0.0
      %1357 = vmatprep.subr.mxu0 0.0
      %1358 = vmatpush1.msra.mxu0 0.0
      %1359 = vmatprep.subr.mxu0 0.0
      %1360 = vmatpush1.msra.mxu0 0.0
      %1361 = vmatprep.subr.mxu0 0.0
      %1362 = vmatpush1.msra.mxu0 0.0
      %1363 = vmatprep.subr.mxu0 0.0
      %1364 = vmatpush1.msra.mxu0 0.0
      %1365 = vmatprep.subr.mxu0 0.0
      %1366 = vmatpush1.msra.mxu0 0.0
      %1367 = vmatprep.subr.mxu0 0.0
      %1368 = vmatpush1.msra.mxu0 0.0
      %1369 = vmatprep.subr.mxu0 0.0
      %1370 = vmatpush1.msra.mxu0 0.0
      %1371 = vmatprep.subr.mxu0 0.0
      %1372 = vmatpush1.msra.mxu0 0.0
      %1373 = vmatprep.subr.mxu0 0.0
      %1374 = vmatpush1.msra.mxu0 0.0
      %1375 = vmatprep.subr.mxu0 0.0
      %1376 = vmatpush1.msra.mxu0 0.0
      %1377 = vmatprep.subr.mxu0 0.0
      %1378 = vmatpush1.msra.mxu0 0.0
      %1379 = vmatprep.subr.mxu0 0.0
      %1380 = vmatpush1.msra.mxu0 0.0
      %1381 = vmatprep.subr.mxu0 0.0
      %1382 = vmatpush1.msra.mxu0 0.0
      %1383 = vmatprep.subr.mxu0 0.0
      %1384 = vmatpush1.msra.mxu0 0.0
      %1385 = vmatprep.subr.mxu0 0.0
      %1386 = vmatpush1.msra.mxu0 0.0
      %1387 = vmatprep.subr.mxu0 0.0
      %1388 = vmatpush1.msra.mxu0 0.0
      %1389 = vmatprep.subr.mxu0 0.0
      %1390 = vmatpush1.msra.mxu0 0.0
      %1391 = vmatprep.subr.mxu0 0.0
      %1392 = vmatpush1.msra.mxu0 0.0
      %1393 = vmatprep.subr.mxu0 0.0
      %1394 = vmatpush1.msra.mxu0 0.0
      %1395 = vmatprep.subr.mxu0 0.0
      %1396 = vmatpush1.msra.mxu0 0.0
      %1397 = vmatprep.subr.mxu0 0.0
      %1398 = vmatpush1.msra.mxu0 0.0
      %1399 = vmatprep.subr.mxu0 0.0
      %1400 = vmatpush1.msra.mxu0 0.0
      %1401 = vmatprep.mubr.f32.mxu0 0.0
      %v1402 = vand.u32 %v363, 4294901760
      %v1403 = vsub.f32 %v363, %v1402
      %v1404 = vand.u32 %v1403, 4294901760
      %1405 = vmatmul.mubr.f32.gmra.mrb[0].mxu0 %v1404
      %v1406 = vpop.f32.mrb[0].mxu0
      %v1407 = vadd.f32 %v1325, %v1406
      %v1408 = vpop.f32.mrb[0].mxu0
      %1409 = vdwg.mxu0
      %1410 = vmatprep.subr.mxu0 0.0
      %v1411 = vand.u32 %v254, 4294901760
      %v1412 = vsub.f32 %v254, %v1411
      %v1413 = vand.u32 %v1412, 4294901760
      %1414 = vmatpush1.msra.mxu0 %v1413
      %1415 = vmatprep.subr.mxu0 0.0
      %v1416 = vand.u32 %v264, 4294901760
      %v1417 = vsub.f32 %v264, %v1416
      %v1418 = vand.u32 %v1417, 4294901760
      %1419 = vmatpush1.msra.mxu0 %v1418
      %1420 = vmatprep.subr.mxu0 0.0
      %v1421 = vand.u32 %v276, 4294901760
      %v1422 = vsub.f32 %v276, %v1421
      %v1423 = vand.u32 %v1422, 4294901760
      %1424 = vmatpush1.msra.mxu0 %v1423
      %1425 = vmatprep.subr.mxu0 0.0
      %v1426 = vand.u32 %v288, 4294901760
      %v1427 = vsub.f32 %v288, %v1426
      %v1428 = vand.u32 %v1427, 4294901760
      %1429 = vmatpush1.msra.mxu0 %v1428
      %1430 = vmatprep.subr.mxu0 0.0
      %v1431 = vand.u32 %v300, 4294901760
      %v1432 = vsub.f32 %v300, %v1431
      %v1433 = vand.u32 %v1432, 4294901760
      %1434 = vmatpush1.msra.mxu0 %v1433
      %1435 = vmatprep.subr.mxu0 0.0
      %v1436 = vand.u32 %v312, 4294901760
      %v1437 = vsub.f32 %v312, %v1436
      %v1438 = vand.u32 %v1437, 4294901760
      %1439 = vmatpush1.msra.mxu0 %v1438
      %1440 = vmatprep.subr.mxu0 0.0
      %v1441 = vand.u32 %v324, 4294901760
      %v1442 = vsub.f32 %v324, %v1441
      %v1443 = vand.u32 %v1442, 4294901760
      %1444 = vmatpush1.msra.mxu0 %v1443
      %1445 = vmatprep.subr.mxu0 0.0
      %v1446 = vand.u32 %v336, 4294901760
      %v1447 = vsub.f32 %v336, %v1446
      %v1448 = vand.u32 %v1447, 4294901760
      %1449 = vmatpush1.msra.mxu0 %v1448
      %1450 = vmatprep.subr.mxu0 0.0
      %v1451 = vand.u32 %v348, 4294901760
      %v1452 = vsub.f32 %v348, %v1451
      %v1453 = vand.u32 %v1452, 4294901760
      %1454 = vmatpush1.msra.mxu0 %v1453
      %1455 = vmatprep.subr.mxu0 0.0
      %1456 = vmatpush1.msra.mxu0 0.0
      %1457 = vmatprep.subr.mxu0 0.0
      %1458 = vmatpush1.msra.mxu0 0.0
      %1459 = vmatprep.subr.mxu0 0.0
      %1460 = vmatpush1.msra.mxu0 0.0
      %1461 = vmatprep.subr.mxu0 0.0
      %1462 = vmatpush1.msra.mxu0 0.0
      %1463 = vmatprep.subr.mxu0 0.0
      %1464 = vmatpush1.msra.mxu0 0.0
      %1465 = vmatprep.subr.mxu0 0.0
      %1466 = vmatpush1.msra.mxu0 0.0
      %1467 = vmatprep.subr.mxu0 0.0
      %1468 = vmatpush1.msra.mxu0 0.0
      %1469 = vmatprep.subr.mxu0 0.0
      %1470 = vmatpush1.msra.mxu0 0.0
      %1471 = vmatprep.subr.mxu0 0.0
      %1472 = vmatpush1.msra.mxu0 0.0
      %1473 = vmatprep.subr.mxu0 0.0
      %1474 = vmatpush1.msra.mxu0 0.0
      %1475 = vmatprep.subr.mxu0 0.0
      %1476 = vmatpush1.msra.mxu0 0.0
      %1477 = vmatprep.subr.mxu0 0.0
      %1478 = vmatpush1.msra.mxu0 0.0
      %1479 = vmatprep.subr.mxu0 0.0
      %1480 = vmatpush1.msra.mxu0 0.0
      %1481 = vmatprep.subr.mxu0 0.0
      %1482 = vmatpush1.msra.mxu0 0.0
      %1483 = vmatprep.subr.mxu0 0.0
      %1484 = vmatpush1.msra.mxu0 0.0
      %1485 = vmatprep.subr.mxu0 0.0
      %1486 = vmatpush1.msra.mxu0 0.0
      %1487 = vmatprep.subr.mxu0 0.0
      %1488 = vmatpush1.msra.mxu0 0.0
      %1489 = vmatprep.subr.mxu0 0.0
      %1490 = vmatpush1.msra.mxu0 0.0
      %1491 = vmatprep.subr.mxu0 0.0
      %1492 = vmatpush1.msra.mxu0 0.0
      %1493 = vmatprep.subr.mxu0 0.0
      %1494 = vmatpush1.msra.mxu0 0.0
      %1495 = vmatprep.subr.mxu0 0.0
      %1496 = vmatpush1.msra.mxu0 0.0
      %1497 = vmatprep.subr.mxu0 0.0
      %1498 = vmatpush1.msra.mxu0 0.0
      %1499 = vmatprep.subr.mxu0 0.0
      %1500 = vmatpush1.msra.mxu0 0.0
      %1501 = vmatprep.mubr.f32.mxu0 0.0
      %v1502 = vand.u32 %v363, 4294901760
      %1503 = vmatmul.mubr.f32.gmra.mrb[0].mxu0 %v1502
      %v1504 = vpop.f32.mrb[0].mxu0
      %v1505 = vadd.f32 %v1407, %v1504
      %v1506 = vpop.f32.mrb[0].mxu0
      %1507 = vdwg.mxu0
      %1508 = vmatprep.subr.mxu0 0.0
      %v1509 = vand.u32 %v254, 4294901760
      %1510 = vmatpush1.msra.mxu0 %v1509
      %1511 = vmatprep.subr.mxu0 0.0
      %v1512 = vand.u32 %v264, 4294901760
      %1513 = vmatpush1.msra.mxu0 %v1512
      %1514 = vmatprep.subr.mxu0 0.0
      %v1515 = vand.u32 %v276, 4294901760
      %1516 = vmatpush1.msra.mxu0 %v1515
      %1517 = vmatprep.subr.mxu0 0.0
      %v1518 = vand.u32 %v288, 4294901760
      %1519 = vmatpush1.msra.mxu0 %v1518
      %1520 = vmatprep.subr.mxu0 0.0
      %v1521 = vand.u32 %v300, 4294901760
      %1522 = vmatpush1.msra.mxu0 %v1521
      %1523 = vmatprep.subr.mxu0 0.0
      %v1524 = vand.u32 %v312, 4294901760
      %1525 = vmatpush1.msra.mxu0 %v1524
      %1526 = vmatprep.subr.mxu0 0.0
      %v1527 = vand.u32 %v324, 4294901760
      %1528 = vmatpush1.msra.mxu0 %v1527
      %1529 = vmatprep.subr.mxu0 0.0
      %v1530 = vand.u32 %v336, 4294901760
      %1531 = vmatpush1.msra.mxu0 %v1530
      %1532 = vmatprep.subr.mxu0 0.0
      %v1533 = vand.u32 %v348, 4294901760
      %1534 = vmatpush1.msra.mxu0 %v1533
      %1535 = vmatprep.subr.mxu0 0.0
      %1536 = vmatpush1.msra.mxu0 0.0
      %1537 = vmatprep.subr.mxu0 0.0
      %1538 = vmatpush1.msra.mxu0 0.0
      %1539 = vmatprep.subr.mxu0 0.0
      %1540 = vmatpush1.msra.mxu0 0.0
      %1541 = vmatprep.subr.mxu0 0.0
      %1542 = vmatpush1.msra.mxu0 0.0
      %1543 = vmatprep.subr.mxu0 0.0
      %1544 = vmatpush1.msra.mxu0 0.0
      %1545 = vmatprep.subr.mxu0 0.0
      %1546 = vmatpush1.msra.mxu0 0.0
      %1547 = vmatprep.subr.mxu0 0.0
      %1548 = vmatpush1.msra.mxu0 0.0
      %1549 = vmatprep.subr.mxu0 0.0
      %1550 = vmatpush1.msra.mxu0 0.0
      %1551 = vmatprep.subr.mxu0 0.0
      %1552 = vmatpush1.msra.mxu0 0.0
      %1553 = vmatprep.subr.mxu0 0.0
      %1554 = vmatpush1.msra.mxu0 0.0
      %1555 = vmatprep.subr.mxu0 0.0
      %1556 = vmatpush1.msra.mxu0 0.0
      %1557 = vmatprep.subr.mxu0 0.0
      %1558 = vmatpush1.msra.mxu0 0.0
      %1559 = vmatprep.subr.mxu0 0.0
      %1560 = vmatpush1.msra.mxu0 0.0
      %1561 = vmatprep.subr.mxu0 0.0
      %1562 = vmatpush1.msra.mxu0 0.0
      %1563 = vmatprep.subr.mxu0 0.0
      %1564 = vmatpush1.msra.mxu0 0.0
      %1565 = vmatprep.subr.mxu0 0.0
      %1566 = vmatpush1.msra.mxu0 0.0
      %1567 = vmatprep.subr.mxu0 0.0
      %1568 = vmatpush1.msra.mxu0 0.0
      %1569 = vmatprep.subr.mxu0 0.0
      %1570 = vmatpush1.msra.mxu0 0.0
      %1571 = vmatprep.subr.mxu0 0.0
      %1572 = vmatpush1.msra.mxu0 0.0
      %1573 = vmatprep.subr.mxu0 0.0
      %1574 = vmatpush1.msra.mxu0 0.0
      %1575 = vmatprep.subr.mxu0 0.0
      %1576 = vmatpush1.msra.mxu0 0.0
      %1577 = vmatprep.subr.mxu0 0.0
      %1578 = vmatpush1.msra.mxu0 0.0
      %1579 = vmatprep.subr.mxu0 0.0
      %1580 = vmatpush1.msra.mxu0 0.0
      %1581 = vmatprep.mubr.f32.mxu0 0.0
      %v1582 = vand.u32 %v363, 4294901760
      %1583 = vmatmul.mubr.f32.gmra.mrb[0].mxu0 %v1582
      %v1584 = vpop.f32.mrb[0].mxu0
      %v1585 = vadd.f32 %v1505, %v1584
      %v1586 = vpop.f32.mrb[0].mxu0
      %1587 = vdwg.mxu0
      %v1588 = vmax.f32 %v1034, 0.0
      %v1589 = vmax.f32 %v1036, 0.0
      %v1590 = vmax.f32 %v1585, 0.0
      %v1591 = vld [vmem:[%s3] sm:$0x7]
      %v1593 = vlaneseq
      %v1594 = vshrl.u32 %v1593, 7
      %v1595 = vsub.s32 0, %v1594
      %v1596 = vrot.slane %v1591, %v1595
      %v1597 = vlaneseq
      %v1598 = vshrl.u32 %v1597, 7
      %v1599 = vsub.s32 1, %v1598
      %v1600 = vrot.slane %v1591, %v1599
      %v1601 = vlaneseq
      %v1602 = vshrl.u32 %v1601, 7
      %v1603 = vsub.s32 2, %v1602
      %v1604 = vrot.slane %v1591, %v1603
      %v1608 = vmul.f32 %v1588, %v1596
      %v1609 = vmul.f32 %v1589, %v1600
      %v1610 = vmul.f32 %v1590, %v1604
      %v1611 = vld [vmem:[%s4] sm:$0xff]
      %1615 = vrot.lane.b32.xlu0 %v1608, 127
      %v1616 = vpop.permute.xlu0 %1615
      %1617 = vrot.lane.b32.xlu0 %v1609, 127
      %v1618 = vpop.permute.xlu0 %1617
      %1619 = vrot.lane.b32.xlu0 %v1610, 127
      %v1620 = vpop.permute.xlu0 %1619
      %v1621 = vsel %vm265, %v1616, %v1618
      %v1622 = vsel %vm265, %v1618, %v1620
      %1626 = vrot.lane.b32.xlu0 %v1608, 126
      %v1627 = vpop.permute.xlu0 %1626
      %1628 = vrot.lane.b32.xlu0 %v1609, 126
      %v1629 = vpop.permute.xlu0 %1628
      %1630 = vrot.lane.b32.xlu0 %v1610, 126
      %v1631 = vpop.permute.xlu0 %1630
      %v1632 = vsel %vm277, %v1627, %v1629
      %v1633 = vsel %vm277, %v1629, %v1631
      %1637 = vrot.lane.b32.xlu0 %v1608, 110
      %v1638 = vpop.permute.xlu0 %1637
      %1639 = vrot.lane.b32.xlu0 %v1609, 110
      %v1640 = vpop.permute.xlu0 %1639
      %1641 = vrot.lane.b32.xlu0 %v1610, 110
      %v1642 = vpop.permute.xlu0 %1641
      %v1643 = vsel %vm289, %v1638, %v1640
      %v1644 = vsel %vm289, %v1640, %v1642
      %1648 = vrot.lane.b32.xlu0 %v1608, 109
      %v1649 = vpop.permute.xlu0 %1648
      %1650 = vrot.lane.b32.xlu0 %v1609, 109
      %v1651 = vpop.permute.xlu0 %1650
      %1652 = vrot.lane.b32.xlu0 %v1610, 109
      %v1653 = vpop.permute.xlu0 %1652
      %v1654 = vsel %vm301, %v1649, %v1651
      %v1655 = vsel %vm301, %v1651, %v1653
      %1659 = vrot.lane.b32.xlu0 %v1608, 108
      %v1660 = vpop.permute.xlu0 %1659
      %1661 = vrot.lane.b32.xlu0 %v1609, 108
      %v1662 = vpop.permute.xlu0 %1661
      %1663 = vrot.lane.b32.xlu0 %v1610, 108
      %v1664 = vpop.permute.xlu0 %1663
      %v1665 = vsel %vm313, %v1660, %v1662
      %v1666 = vsel %vm313, %v1662, %v1664
      %1670 = vrot.lane.b32.xlu0 %v1608, 92
      %v1671 = vpop.permute.xlu0 %1670
      %1672 = vrot.lane.b32.xlu0 %v1609, 92
      %v1673 = vpop.permute.xlu0 %1672
      %1674 = vrot.lane.b32.xlu0 %v1610, 92
      %v1675 = vpop.permute.xlu0 %1674
      %v1676 = vsel %vm325, %v1671, %v1673
      %v1677 = vsel %vm325, %v1673, %v1675
      %1681 = vrot.lane.b32.xlu0 %v1608, 91
      %v1682 = vpop.permute.xlu0 %1681
      %1683 = vrot.lane.b32.xlu0 %v1609, 91
      %v1684 = vpop.permute.xlu0 %1683
      %1685 = vrot.lane.b32.xlu0 %v1610, 91
      %v1686 = vpop.permute.xlu0 %1685
      %v1687 = vsel %vm337, %v1682, %v1684
      %v1688 = vsel %vm337, %v1684, %v1686
      %1692 = vrot.lane.b32.xlu0 %v1608, 90
      %v1693 = vpop.permute.xlu0 %1692
      %1694 = vrot.lane.b32.xlu0 %v1609, 90
      %v1695 = vpop.permute.xlu0 %1694
      %1696 = vrot.lane.b32.xlu0 %v1610, 90
      %v1697 = vpop.permute.xlu0 %1696
      %v1698 = vsel %vm349, %v1693, %v1695
      %v1699 = vsel %vm349, %v1695, %v1697
      %v1703 = vld [vmem:[%s5] sm:$0xff]
      %1705 = vset.pattern.permute.xlu0 0
      %1706 = vperm.xlu0 %1705, %v1703
      %v1707 = vpop.permute.xlu0 %1706
      %v1710 = vsel %vm361, %v1611, 0
      %v1712 = vand.u32 %v1609, 4294901760
      %1713 = vmatprep.subr.mxu0 %v1712
      %v1714 = vand.u32 %v1608, 4294901760
      %1715 = vmatpush1.msra.mxu0 %v1714
      %v1716 = vand.u32 %v1622, 4294901760
      %1717 = vmatprep.subr.mxu0 %v1716
      %v1718 = vand.u32 %v1621, 4294901760
      %1719 = vmatpush1.msra.mxu0 %v1718
      %v1720 = vand.u32 %v1633, 4294901760
      %1721 = vmatprep.subr.mxu0 %v1720
      %v1722 = vand.u32 %v1632, 4294901760
      %1723 = vmatpush1.msra.mxu0 %v1722
      %v1724 = vand.u32 %v1644, 4294901760
      %1725 = vmatprep.subr.mxu0 %v1724
      %v1726 = vand.u32 %v1643, 4294901760
      %1727 = vmatpush1.msra.mxu0 %v1726
      %v1728 = vand.u32 %v1655, 4294901760
      %1729 = vmatprep.subr.mxu0 %v1728
      %v1730 = vand.u32 %v1654, 4294901760
      %1731 = vmatpush1.msra.mxu0 %v1730
      %v1732 = vand.u32 %v1666, 4294901760
      %1733 = vmatprep.subr.mxu0 %v1732
      %v1734 = vand.u32 %v1665, 4294901760
      %1735 = vmatpush1.msra.mxu0 %v1734
      %v1736 = vand.u32 %v1677, 4294901760
      %1737 = vmatprep.subr.mxu0 %v1736
      %v1738 = vand.u32 %v1676, 4294901760
      %1739 = vmatpush1.msra.mxu0 %v1738
      %v1740 = vand.u32 %v1688, 4294901760
      %1741 = vmatprep.subr.mxu0 %v1740
      %v1742 = vand.u32 %v1687, 4294901760
      %1743 = vmatpush1.msra.mxu0 %v1742
      %v1744 = vand.u32 %v1699, 4294901760
      %1745 = vmatprep.subr.mxu0 %v1744
      %v1746 = vand.u32 %v1698, 4294901760
      %1747 = vmatpush1.msra.mxu0 %v1746
      %1748 = vmatprep.subr.mxu0 0.0
      %1749 = vmatpush1.msra.mxu0 0.0
      %1750 = vmatprep.subr.mxu0 0.0
      %1751 = vmatpush1.msra.mxu0 0.0
      %1752 = vmatprep.subr.mxu0 0.0
      %1753 = vmatpush1.msra.mxu0 0.0
      %1754 = vmatprep.subr.mxu0 0.0
      %1755 = vmatpush1.msra.mxu0 0.0
      %1756 = vmatprep.subr.mxu0 0.0
      %1757 = vmatpush1.msra.mxu0 0.0
      %1758 = vmatprep.subr.mxu0 0.0
      %1759 = vmatpush1.msra.mxu0 0.0
      %1760 = vmatprep.subr.mxu0 0.0
      %1761 = vmatpush1.msra.mxu0 0.0
      %1762 = vmatprep.subr.mxu0 0.0
      %1763 = vmatpush1.msra.mxu0 0.0
      %1764 = vmatprep.subr.mxu0 0.0
      %1765 = vmatpush1.msra.mxu0 0.0
      %1766 = vmatprep.subr.mxu0 0.0
      %1767 = vmatpush1.msra.mxu0 0.0
      %1768 = vmatprep.subr.mxu0 0.0
      %1769 = vmatpush1.msra.mxu0 0.0
      %1770 = vmatprep.subr.mxu0 0.0
      %1771 = vmatpush1.msra.mxu0 0.0
      %1772 = vmatprep.subr.mxu0 0.0
      %1773 = vmatpush1.msra.mxu0 0.0
      %1774 = vmatprep.subr.mxu0 0.0
      %1775 = vmatpush1.msra.mxu0 0.0
      %1776 = vmatprep.subr.mxu0 0.0
      %1777 = vmatpush1.msra.mxu0 0.0
      %1778 = vmatprep.subr.mxu0 0.0
      %1779 = vmatpush1.msra.mxu0 0.0
      %1780 = vmatprep.subr.mxu0 0.0
      %1781 = vmatpush1.msra.mxu0 0.0
      %1782 = vmatprep.subr.mxu0 0.0
      %1783 = vmatpush1.msra.mxu0 0.0
      %1784 = vmatprep.subr.mxu0 0.0
      %1785 = vmatpush1.msra.mxu0 0.0
      %1786 = vmatprep.subr.mxu0 0.0
      %1787 = vmatpush1.msra.mxu0 0.0
      %1788 = vmatprep.subr.mxu0 0.0
      %1789 = vmatpush1.msra.mxu0 0.0
      %1790 = vmatprep.subr.mxu0 0.0
      %1791 = vmatpush1.msra.mxu0 0.0
      %1792 = vmatprep.subr.mxu0 0.0
      %1793 = vmatpush1.msra.mxu0 0.0
      %1794 = vmatprep.mubr.f32.mxu0 0.0
      %v1795 = vand.u32 %v1710, 4294901760
      %v1796 = vsub.f32 %v1710, %v1795
      %v1797 = vand.u32 %v1796, 4294901760
      %v1798 = vsub.f32 %v1796, %v1797
      %v1799 = vand.u32 %v1798, 4294901760
      %1800 = vmatmul.mubr.f32.gmra.mrb[0].mxu0 %v1799
      %v1801 = vpop.f32.mrb[0].mxu0
      %v1802 = vadd.f32 %v1707, %v1801
      %v1803 = vpop.f32.mrb[0].mxu0
      %v1804 = vadd.f32 %v1707, %v1803
      %1805 = vdwg.mxu0
      %v1806 = vand.u32 %v1609, 4294901760
      %v1807 = vsub.f32 %v1609, %v1806
      %v1808 = vand.u32 %v1807, 4294901760
      %v1809 = vsub.f32 %v1807, %v1808
      %v1810 = vand.u32 %v1809, 4294901760
      %1811 = vmatprep.subr.mxu0 %v1810
      %v1812 = vand.u32 %v1608, 4294901760
      %v1813 = vsub.f32 %v1608, %v1812
      %v1814 = vand.u32 %v1813, 4294901760
      %v1815 = vsub.f32 %v1813, %v1814
      %v1816 = vand.u32 %v1815, 4294901760
      %1817 = vmatpush1.msra.mxu0 %v1816
      %v1818 = vand.u32 %v1622, 4294901760
      %v1819 = vsub.f32 %v1622, %v1818
      %v1820 = vand.u32 %v1819, 4294901760
      %v1821 = vsub.f32 %v1819, %v1820
      %v1822 = vand.u32 %v1821, 4294901760
      %1823 = vmatprep.subr.mxu0 %v1822
      %v1824 = vand.u32 %v1621, 4294901760
      %v1825 = vsub.f32 %v1621, %v1824
      %v1826 = vand.u32 %v1825, 4294901760
      %v1827 = vsub.f32 %v1825, %v1826
      %v1828 = vand.u32 %v1827, 4294901760
      %1829 = vmatpush1.msra.mxu0 %v1828
      %v1830 = vand.u32 %v1633, 4294901760
      %v1831 = vsub.f32 %v1633, %v1830
      %v1832 = vand.u32 %v1831, 4294901760
      %v1833 = vsub.f32 %v1831, %v1832
      %v1834 = vand.u32 %v1833, 4294901760
      %1835 = vmatprep.subr.mxu0 %v1834
      %v1836 = vand.u32 %v1632, 4294901760
      %v1837 = vsub.f32 %v1632, %v1836
      %v1838 = vand.u32 %v1837, 4294901760
      %v1839 = vsub.f32 %v1837, %v1838
      %v1840 = vand.u32 %v1839, 4294901760
      %1841 = vmatpush1.msra.mxu0 %v1840
      %v1842 = vand.u32 %v1644, 4294901760
      %v1843 = vsub.f32 %v1644, %v1842
      %v1844 = vand.u32 %v1843, 4294901760
      %v1845 = vsub.f32 %v1843, %v1844
      %v1846 = vand.u32 %v1845, 4294901760
      %1847 = vmatprep.subr.mxu0 %v1846
      %v1848 = vand.u32 %v1643, 4294901760
      %v1849 = vsub.f32 %v1643, %v1848
      %v1850 = vand.u32 %v1849, 4294901760
      %v1851 = vsub.f32 %v1849, %v1850
      %v1852 = vand.u32 %v1851, 4294901760
      %1853 = vmatpush1.msra.mxu0 %v1852
      %v1854 = vand.u32 %v1655, 4294901760
      %v1855 = vsub.f32 %v1655, %v1854
      %v1856 = vand.u32 %v1855, 4294901760
      %v1857 = vsub.f32 %v1855, %v1856
      %v1858 = vand.u32 %v1857, 4294901760
      %1859 = vmatprep.subr.mxu0 %v1858
      %v1860 = vand.u32 %v1654, 4294901760
      %v1861 = vsub.f32 %v1654, %v1860
      %v1862 = vand.u32 %v1861, 4294901760
      %v1863 = vsub.f32 %v1861, %v1862
      %v1864 = vand.u32 %v1863, 4294901760
      %1865 = vmatpush1.msra.mxu0 %v1864
      %v1866 = vand.u32 %v1666, 4294901760
      %v1867 = vsub.f32 %v1666, %v1866
      %v1868 = vand.u32 %v1867, 4294901760
      %v1869 = vsub.f32 %v1867, %v1868
      %v1870 = vand.u32 %v1869, 4294901760
      %1871 = vmatprep.subr.mxu0 %v1870
      %v1872 = vand.u32 %v1665, 4294901760
      %v1873 = vsub.f32 %v1665, %v1872
      %v1874 = vand.u32 %v1873, 4294901760
      %v1875 = vsub.f32 %v1873, %v1874
      %v1876 = vand.u32 %v1875, 4294901760
      %1877 = vmatpush1.msra.mxu0 %v1876
      %v1878 = vand.u32 %v1677, 4294901760
      %v1879 = vsub.f32 %v1677, %v1878
      %v1880 = vand.u32 %v1879, 4294901760
      %v1881 = vsub.f32 %v1879, %v1880
      %v1882 = vand.u32 %v1881, 4294901760
      %1883 = vmatprep.subr.mxu0 %v1882
      %v1884 = vand.u32 %v1676, 4294901760
      %v1885 = vsub.f32 %v1676, %v1884
      %v1886 = vand.u32 %v1885, 4294901760
      %v1887 = vsub.f32 %v1885, %v1886
      %v1888 = vand.u32 %v1887, 4294901760
      %1889 = vmatpush1.msra.mxu0 %v1888
      %v1890 = vand.u32 %v1688, 4294901760
      %v1891 = vsub.f32 %v1688, %v1890
      %v1892 = vand.u32 %v1891, 4294901760
      %v1893 = vsub.f32 %v1891, %v1892
      %v1894 = vand.u32 %v1893, 4294901760
      %1895 = vmatprep.subr.mxu0 %v1894
      %v1896 = vand.u32 %v1687, 4294901760
      %v1897 = vsub.f32 %v1687, %v1896
      %v1898 = vand.u32 %v1897, 4294901760
      %v1899 = vsub.f32 %v1897, %v1898
      %v1900 = vand.u32 %v1899, 4294901760
      %1901 = vmatpush1.msra.mxu0 %v1900
      %v1902 = vand.u32 %v1699, 4294901760
      %v1903 = vsub.f32 %v1699, %v1902
      %v1904 = vand.u32 %v1903, 4294901760
      %v1905 = vsub.f32 %v1903, %v1904
      %v1906 = vand.u32 %v1905, 4294901760
      %1907 = vmatprep.subr.mxu0 %v1906
      %v1908 = vand.u32 %v1698, 4294901760
      %v1909 = vsub.f32 %v1698, %v1908
      %v1910 = vand.u32 %v1909, 4294901760
      %v1911 = vsub.f32 %v1909, %v1910
      %v1912 = vand.u32 %v1911, 4294901760
      %1913 = vmatpush1.msra.mxu0 %v1912
      %1914 = vmatprep.subr.mxu0 0.0
      %1915 = vmatpush1.msra.mxu0 0.0
      %1916 = vmatprep.subr.mxu0 0.0
      %1917 = vmatpush1.msra.mxu0 0.0
      %1918 = vmatprep.subr.mxu0 0.0
      %1919 = vmatpush1.msra.mxu0 0.0
      %1920 = vmatprep.subr.mxu0 0.0
      %1921 = vmatpush1.msra.mxu0 0.0
      %1922 = vmatprep.subr.mxu0 0.0
      %1923 = vmatpush1.msra.mxu0 0.0
      %1924 = vmatprep.subr.mxu0 0.0
      %1925 = vmatpush1.msra.mxu0 0.0
      %1926 = vmatprep.subr.mxu0 0.0
      %1927 = vmatpush1.msra.mxu0 0.0
      %1928 = vmatprep.subr.mxu0 0.0
      %1929 = vmatpush1.msra.mxu0 0.0
      %1930 = vmatprep.subr.mxu0 0.0
      %1931 = vmatpush1.msra.mxu0 0.0
      %1932 = vmatprep.subr.mxu0 0.0
      %1933 = vmatpush1.msra.mxu0 0.0
      %1934 = vmatprep.subr.mxu0 0.0
      %1935 = vmatpush1.msra.mxu0 0.0
      %1936 = vmatprep.subr.mxu0 0.0
      %1937 = vmatpush1.msra.mxu0 0.0
      %1938 = vmatprep.subr.mxu0 0.0
      %1939 = vmatpush1.msra.mxu0 0.0
      %1940 = vmatprep.subr.mxu0 0.0
      %1941 = vmatpush1.msra.mxu0 0.0
      %1942 = vmatprep.subr.mxu0 0.0
      %1943 = vmatpush1.msra.mxu0 0.0
      %1944 = vmatprep.subr.mxu0 0.0
      %1945 = vmatpush1.msra.mxu0 0.0
      %1946 = vmatprep.subr.mxu0 0.0
      %1947 = vmatpush1.msra.mxu0 0.0
      %1948 = vmatprep.subr.mxu0 0.0
      %1949 = vmatpush1.msra.mxu0 0.0
      %1950 = vmatprep.subr.mxu0 0.0
      %1951 = vmatpush1.msra.mxu0 0.0
      %1952 = vmatprep.subr.mxu0 0.0
      %1953 = vmatpush1.msra.mxu0 0.0
      %1954 = vmatprep.subr.mxu0 0.0
      %1955 = vmatpush1.msra.mxu0 0.0
      %1956 = vmatprep.subr.mxu0 0.0
      %1957 = vmatpush1.msra.mxu0 0.0
      %1958 = vmatprep.subr.mxu0 0.0
      %1959 = vmatpush1.msra.mxu0 0.0
      %1960 = vmatprep.mubr.f32.mxu0 0.0
      %v1961 = vand.u32 %v1710, 4294901760
      %1962 = vmatmul.mubr.f32.gmra.mrb[0].mxu0 %v1961
      %v1963 = vpop.f32.mrb[0].mxu0
      %v1964 = vadd.f32 %v1802, %v1963
      %v1965 = vpop.f32.mrb[0].mxu0
      %v1966 = vadd.f32 %v1804, %v1965
      %1967 = vdwg.mxu0
      %v1968 = vand.u32 %v1609, 4294901760
      %v1969 = vsub.f32 %v1609, %v1968
      %1970 = vmatprep.subr.mxu0 %v1969
      %v1971 = vand.u32 %v1608, 4294901760
      %v1972 = vsub.f32 %v1608, %v1971
      %1973 = vmatpush1.msra.mxu0 %v1972
      %v1974 = vand.u32 %v1622, 4294901760
      %v1975 = vsub.f32 %v1622, %v1974
      %1976 = vmatprep.subr.mxu0 %v1975
      %v1977 = vand.u32 %v1621, 4294901760
      %v1978 = vsub.f32 %v1621, %v1977
      %1979 = vmatpush1.msra.mxu0 %v1978
      %v1980 = vand.u32 %v1633, 4294901760
      %v1981 = vsub.f32 %v1633, %v1980
      %1982 = vmatprep.subr.mxu0 %v1981
      %v1983 = vand.u32 %v1632, 4294901760
      %v1984 = vsub.f32 %v1632, %v1983
      %1985 = vmatpush1.msra.mxu0 %v1984
      %v1986 = vand.u32 %v1644, 4294901760
      %v1987 = vsub.f32 %v1644, %v1986
      %1988 = vmatprep.subr.mxu0 %v1987
      %v1989 = vand.u32 %v1643, 4294901760
      %v1990 = vsub.f32 %v1643, %v1989
      %1991 = vmatpush1.msra.mxu0 %v1990
      %v1992 = vand.u32 %v1655, 4294901760
      %v1993 = vsub.f32 %v1655, %v1992
      %1994 = vmatprep.subr.mxu0 %v1993
      %v1995 = vand.u32 %v1654, 4294901760
      %v1996 = vsub.f32 %v1654, %v1995
      %1997 = vmatpush1.msra.mxu0 %v1996
      %v1998 = vand.u32 %v1666, 4294901760
      %v1999 = vsub.f32 %v1666, %v1998
      %2000 = vmatprep.subr.mxu0 %v1999
      %v2001 = vand.u32 %v1665, 4294901760
      %v2002 = vsub.f32 %v1665, %v2001
      %2003 = vmatpush1.msra.mxu0 %v2002
      %v2004 = vand.u32 %v1677, 4294901760
      %v2005 = vsub.f32 %v1677, %v2004
      %2006 = vmatprep.subr.mxu0 %v2005
      %v2007 = vand.u32 %v1676, 4294901760
      %v2008 = vsub.f32 %v1676, %v2007
      %2009 = vmatpush1.msra.mxu0 %v2008
      %v2010 = vand.u32 %v1688, 4294901760
      %v2011 = vsub.f32 %v1688, %v2010
      %2012 = vmatprep.subr.mxu0 %v2011
      %v2013 = vand.u32 %v1687, 4294901760
      %v2014 = vsub.f32 %v1687, %v2013
      %2015 = vmatpush1.msra.mxu0 %v2014
      %v2016 = vand.u32 %v1699, 4294901760
      %v2017 = vsub.f32 %v1699, %v2016
      %2018 = vmatprep.subr.mxu0 %v2017
      %v2019 = vand.u32 %v1698, 4294901760
      %v2020 = vsub.f32 %v1698, %v2019
      %2021 = vmatpush1.msra.mxu0 %v2020
      %2022 = vmatprep.subr.mxu0 0.0
      %2023 = vmatpush1.msra.mxu0 0.0
      %2024 = vmatprep.subr.mxu0 0.0
      %2025 = vmatpush1.msra.mxu0 0.0
      %2026 = vmatprep.subr.mxu0 0.0
      %2027 = vmatpush1.msra.mxu0 0.0
      %2028 = vmatprep.subr.mxu0 0.0
      %2029 = vmatpush1.msra.mxu0 0.0
      %2030 = vmatprep.subr.mxu0 0.0
      %2031 = vmatpush1.msra.mxu0 0.0
      %2032 = vmatprep.subr.mxu0 0.0
      %2033 = vmatpush1.msra.mxu0 0.0
      %2034 = vmatprep.subr.mxu0 0.0
      %2035 = vmatpush1.msra.mxu0 0.0
      %2036 = vmatprep.subr.mxu0 0.0
      %2037 = vmatpush1.msra.mxu0 0.0
      %2038 = vmatprep.subr.mxu0 0.0
      %2039 = vmatpush1.msra.mxu0 0.0
      %2040 = vmatprep.subr.mxu0 0.0
      %2041 = vmatpush1.msra.mxu0 0.0
      %2042 = vmatprep.subr.mxu0 0.0
      %2043 = vmatpush1.msra.mxu0 0.0
      %2044 = vmatprep.subr.mxu0 0.0
      %2045 = vmatpush1.msra.mxu0 0.0
      %2046 = vmatprep.subr.mxu0 0.0
      %2047 = vmatpush1.msra.mxu0 0.0
      %2048 = vmatprep.subr.mxu0 0.0
      %2049 = vmatpush1.msra.mxu0 0.0
      %2050 = vmatprep.subr.mxu0 0.0
      %2051 = vmatpush1.msra.mxu0 0.0
      %2052 = vmatprep.subr.mxu0 0.0
      %2053 = vmatpush1.msra.mxu0 0.0
      %2054 = vmatprep.subr.mxu0 0.0
      %2055 = vmatpush1.msra.mxu0 0.0
      %2056 = vmatprep.subr.mxu0 0.0
      %2057 = vmatpush1.msra.mxu0 0.0
      %2058 = vmatprep.subr.mxu0 0.0
      %2059 = vmatpush1.msra.mxu0 0.0
      %2060 = vmatprep.subr.mxu0 0.0
      %2061 = vmatpush1.msra.mxu0 0.0
      %2062 = vmatprep.subr.mxu0 0.0
      %2063 = vmatpush1.msra.mxu0 0.0
      %2064 = vmatprep.subr.mxu0 0.0
      %2065 = vmatpush1.msra.mxu0 0.0
      %2066 = vmatprep.subr.mxu0 0.0
      %2067 = vmatpush1.msra.mxu0 0.0
      %2068 = vmatprep.mubr.f32.mxu0 0.0
      %v2069 = vand.u32 %v1710, 4294901760
      %v2070 = vsub.f32 %v1710, %v2069
      %2071 = vmatmul.mubr.f32.gmra.mrb[0].mxu0 %v2070
      %v2072 = vpop.f32.mrb[0].mxu0
      %v2073 = vadd.f32 %v1964, %v2072
      %v2074 = vpop.f32.mrb[0].mxu0
      %v2075 = vadd.f32 %v1966, %v2074
      %2076 = vdwg.mxu0
      %v2077 = vand.u32 %v1609, 4294901760
      %2078 = vmatprep.subr.mxu0 %v2077
      %v2079 = vand.u32 %v1608, 4294901760
      %2080 = vmatpush1.msra.mxu0 %v2079
      %v2081 = vand.u32 %v1622, 4294901760
      %2082 = vmatprep.subr.mxu0 %v2081
      %v2083 = vand.u32 %v1621, 4294901760
      %2084 = vmatpush1.msra.mxu0 %v2083
      %v2085 = vand.u32 %v1633, 4294901760
      %2086 = vmatprep.subr.mxu0 %v2085
      %v2087 = vand.u32 %v1632, 4294901760
      %2088 = vmatpush1.msra.mxu0 %v2087
      %v2089 = vand.u32 %v1644, 4294901760
      %2090 = vmatprep.subr.mxu0 %v2089
      %v2091 = vand.u32 %v1643, 4294901760
      %2092 = vmatpush1.msra.mxu0 %v2091
      %v2093 = vand.u32 %v1655, 4294901760
      %2094 = vmatprep.subr.mxu0 %v2093
      %v2095 = vand.u32 %v1654, 4294901760
      %2096 = vmatpush1.msra.mxu0 %v2095
      %v2097 = vand.u32 %v1666, 4294901760
      %2098 = vmatprep.subr.mxu0 %v2097
      %v2099 = vand.u32 %v1665, 4294901760
      %2100 = vmatpush1.msra.mxu0 %v2099
      %v2101 = vand.u32 %v1677, 4294901760
      %2102 = vmatprep.subr.mxu0 %v2101
      %v2103 = vand.u32 %v1676, 4294901760
      %2104 = vmatpush1.msra.mxu0 %v2103
      %v2105 = vand.u32 %v1688, 4294901760
      %2106 = vmatprep.subr.mxu0 %v2105
      %v2107 = vand.u32 %v1687, 4294901760
      %2108 = vmatpush1.msra.mxu0 %v2107
      %v2109 = vand.u32 %v1699, 4294901760
      %2110 = vmatprep.subr.mxu0 %v2109
      %v2111 = vand.u32 %v1698, 4294901760
      %2112 = vmatpush1.msra.mxu0 %v2111
      %2113 = vmatprep.subr.mxu0 0.0
      %2114 = vmatpush1.msra.mxu0 0.0
      %2115 = vmatprep.subr.mxu0 0.0
      %2116 = vmatpush1.msra.mxu0 0.0
      %2117 = vmatprep.subr.mxu0 0.0
      %2118 = vmatpush1.msra.mxu0 0.0
      %2119 = vmatprep.subr.mxu0 0.0
      %2120 = vmatpush1.msra.mxu0 0.0
      %2121 = vmatprep.subr.mxu0 0.0
      %2122 = vmatpush1.msra.mxu0 0.0
      %2123 = vmatprep.subr.mxu0 0.0
      %2124 = vmatpush1.msra.mxu0 0.0
      %2125 = vmatprep.subr.mxu0 0.0
      %2126 = vmatpush1.msra.mxu0 0.0
      %2127 = vmatprep.subr.mxu0 0.0
      %2128 = vmatpush1.msra.mxu0 0.0
      %2129 = vmatprep.subr.mxu0 0.0
      %2130 = vmatpush1.msra.mxu0 0.0
      %2131 = vmatprep.subr.mxu0 0.0
      %2132 = vmatpush1.msra.mxu0 0.0
      %2133 = vmatprep.subr.mxu0 0.0
      %2134 = vmatpush1.msra.mxu0 0.0
      %2135 = vmatprep.subr.mxu0 0.0
      %2136 = vmatpush1.msra.mxu0 0.0
      %2137 = vmatprep.subr.mxu0 0.0
      %2138 = vmatpush1.msra.mxu0 0.0
      %2139 = vmatprep.subr.mxu0 0.0
      %2140 = vmatpush1.msra.mxu0 0.0
      %2141 = vmatprep.subr.mxu0 0.0
      %2142 = vmatpush1.msra.mxu0 0.0
      %2143 = vmatprep.subr.mxu0 0.0
      %2144 = vmatpush1.msra.mxu0 0.0
      %2145 = vmatprep.subr.mxu0 0.0
      %2146 = vmatpush1.msra.mxu0 0.0
      %2147 = vmatprep.subr.mxu0 0.0
      %2148 = vmatpush1.msra.mxu0 0.0
      %2149 = vmatprep.subr.mxu0 0.0
      %2150 = vmatpush1.msra.mxu0 0.0
      %2151 = vmatprep.subr.mxu0 0.0
      %2152 = vmatpush1.msra.mxu0 0.0
      %2153 = vmatprep.subr.mxu0 0.0
      %2154 = vmatpush1.msra.mxu0 0.0
      %2155 = vmatprep.subr.mxu0 0.0
      %2156 = vmatpush1.msra.mxu0 0.0
      %2157 = vmatprep.subr.mxu0 0.0
      %2158 = vmatpush1.msra.mxu0 0.0
      %2159 = vmatprep.mubr.f32.mxu0 0.0
      %v2160 = vand.u32 %v1710, 4294901760
      %v2161 = vsub.f32 %v1710, %v2160
      %v2162 = vand.u32 %v2161, 4294901760
      %2163 = vmatmul.mubr.f32.gmra.mrb[0].mxu0 %v2162
      %v2164 = vpop.f32.mrb[0].mxu0
      %v2165 = vadd.f32 %v2073, %v2164
      %v2166 = vpop.f32.mrb[0].mxu0
      %v2167 = vadd.f32 %v2075, %v2166
      %2168 = vdwg.mxu0
      %v2169 = vand.u32 %v1609, 4294901760
      %v2170 = vsub.f32 %v1609, %v2169
      %v2171 = vand.u32 %v2170, 4294901760
      %2172 = vmatprep.subr.mxu0 %v2171
      %v2173 = vand.u32 %v1608, 4294901760
      %v2174 = vsub.f32 %v1608, %v2173
      %v2175 = vand.u32 %v2174, 4294901760
      %2176 = vmatpush1.msra.mxu0 %v2175
      %v2177 = vand.u32 %v1622, 4294901760
      %v2178 = vsub.f32 %v1622, %v2177
      %v2179 = vand.u32 %v2178, 4294901760
      %2180 = vmatprep.subr.mxu0 %v2179
      %v2181 = vand.u32 %v1621, 4294901760
      %v2182 = vsub.f32 %v1621, %v2181
      %v2183 = vand.u32 %v2182, 4294901760
      %2184 = vmatpush1.msra.mxu0 %v2183
      %v2185 = vand.u32 %v1633, 4294901760
      %v2186 = vsub.f32 %v1633, %v2185
      %v2187 = vand.u32 %v2186, 4294901760
      %2188 = vmatprep.subr.mxu0 %v2187
      %v2189 = vand.u32 %v1632, 4294901760
      %v2190 = vsub.f32 %v1632, %v2189
      %v2191 = vand.u32 %v2190, 4294901760
      %2192 = vmatpush1.msra.mxu0 %v2191
      %v2193 = vand.u32 %v1644, 4294901760
      %v2194 = vsub.f32 %v1644, %v2193
      %v2195 = vand.u32 %v2194, 4294901760
      %2196 = vmatprep.subr.mxu0 %v2195
      %v2197 = vand.u32 %v1643, 4294901760
      %v2198 = vsub.f32 %v1643, %v2197
      %v2199 = vand.u32 %v2198, 4294901760
      %2200 = vmatpush1.msra.mxu0 %v2199
      %v2201 = vand.u32 %v1655, 4294901760
      %v2202 = vsub.f32 %v1655, %v2201
      %v2203 = vand.u32 %v2202, 4294901760
      %2204 = vmatprep.subr.mxu0 %v2203
      %v2205 = vand.u32 %v1654, 4294901760
      %v2206 = vsub.f32 %v1654, %v2205
      %v2207 = vand.u32 %v2206, 4294901760
      %2208 = vmatpush1.msra.mxu0 %v2207
      %v2209 = vand.u32 %v1666, 4294901760
      %v2210 = vsub.f32 %v1666, %v2209
      %v2211 = vand.u32 %v2210, 4294901760
      %2212 = vmatprep.subr.mxu0 %v2211
      %v2213 = vand.u32 %v1665, 4294901760
      %v2214 = vsub.f32 %v1665, %v2213
      %v2215 = vand.u32 %v2214, 4294901760
      %2216 = vmatpush1.msra.mxu0 %v2215
      %v2217 = vand.u32 %v1677, 4294901760
      %v2218 = vsub.f32 %v1677, %v2217
      %v2219 = vand.u32 %v2218, 4294901760
      %2220 = vmatprep.subr.mxu0 %v2219
      %v2221 = vand.u32 %v1676, 4294901760
      %v2222 = vsub.f32 %v1676, %v2221
      %v2223 = vand.u32 %v2222, 4294901760
      %2224 = vmatpush1.msra.mxu0 %v2223
      %v2225 = vand.u32 %v1688, 4294901760
      %v2226 = vsub.f32 %v1688, %v2225
      %v2227 = vand.u32 %v2226, 4294901760
      %2228 = vmatprep.subr.mxu0 %v2227
      %v2229 = vand.u32 %v1687, 4294901760
      %v2230 = vsub.f32 %v1687, %v2229
      %v2231 = vand.u32 %v2230, 4294901760
      %2232 = vmatpush1.msra.mxu0 %v2231
      %v2233 = vand.u32 %v1699, 4294901760
      %v2234 = vsub.f32 %v1699, %v2233
      %v2235 = vand.u32 %v2234, 4294901760
      %2236 = vmatprep.subr.mxu0 %v2235
      %v2237 = vand.u32 %v1698, 4294901760
      %v2238 = vsub.f32 %v1698, %v2237
      %v2239 = vand.u32 %v2238, 4294901760
      %2240 = vmatpush1.msra.mxu0 %v2239
      %2241 = vmatprep.subr.mxu0 0.0
      %2242 = vmatpush1.msra.mxu0 0.0
      %2243 = vmatprep.subr.mxu0 0.0
      %2244 = vmatpush1.msra.mxu0 0.0
      %2245 = vmatprep.subr.mxu0 0.0
      %2246 = vmatpush1.msra.mxu0 0.0
      %2247 = vmatprep.subr.mxu0 0.0
      %2248 = vmatpush1.msra.mxu0 0.0
      %2249 = vmatprep.subr.mxu0 0.0
      %2250 = vmatpush1.msra.mxu0 0.0
      %2251 = vmatprep.subr.mxu0 0.0
      %2252 = vmatpush1.msra.mxu0 0.0
      %2253 = vmatprep.subr.mxu0 0.0
      %2254 = vmatpush1.msra.mxu0 0.0
      %2255 = vmatprep.subr.mxu0 0.0
      %2256 = vmatpush1.msra.mxu0 0.0
      %2257 = vmatprep.subr.mxu0 0.0
      %2258 = vmatpush1.msra.mxu0 0.0
      %2259 = vmatprep.subr.mxu0 0.0
      %2260 = vmatpush1.msra.mxu0 0.0
      %2261 = vmatprep.subr.mxu0 0.0
      %2262 = vmatpush1.msra.mxu0 0.0
      %2263 = vmatprep.subr.mxu0 0.0
      %2264 = vmatpush1.msra.mxu0 0.0
      %2265 = vmatprep.subr.mxu0 0.0
      %2266 = vmatpush1.msra.mxu0 0.0
      %2267 = vmatprep.subr.mxu0 0.0
      %2268 = vmatpush1.msra.mxu0 0.0
      %2269 = vmatprep.subr.mxu0 0.0
      %2270 = vmatpush1.msra.mxu0 0.0
      %2271 = vmatprep.subr.mxu0 0.0
      %2272 = vmatpush1.msra.mxu0 0.0
      %2273 = vmatprep.subr.mxu0 0.0
      %2274 = vmatpush1.msra.mxu0 0.0
      %2275 = vmatprep.subr.mxu0 0.0
      %2276 = vmatpush1.msra.mxu0 0.0
      %2277 = vmatprep.subr.mxu0 0.0
      %2278 = vmatpush1.msra.mxu0 0.0
      %2279 = vmatprep.subr.mxu0 0.0
      %2280 = vmatpush1.msra.mxu0 0.0
      %2281 = vmatprep.subr.mxu0 0.0
      %2282 = vmatpush1.msra.mxu0 0.0
      %2283 = vmatprep.subr.mxu0 0.0
      %2284 = vmatpush1.msra.mxu0 0.0
      %2285 = vmatprep.subr.mxu0 0.0
      %2286 = vmatpush1.msra.mxu0 0.0
      %2287 = vmatprep.mubr.f32.mxu0 0.0
      %v2288 = vand.u32 %v1710, 4294901760
      %2289 = vmatmul.mubr.f32.gmra.mrb[0].mxu0 %v2288
      %v2290 = vpop.f32.mrb[0].mxu0
      %v2291 = vadd.f32 %v2165, %v2290
      %v2292 = vpop.f32.mrb[0].mxu0
      %v2293 = vadd.f32 %v2167, %v2292
      %2294 = vdwg.mxu0
      %v2295 = vand.u32 %v1609, 4294901760
      %2296 = vmatprep.subr.mxu0 %v2295
      %v2297 = vand.u32 %v1608, 4294901760
      %2298 = vmatpush1.msra.mxu0 %v2297
      %v2299 = vand.u32 %v1622, 4294901760
      %2300 = vmatprep.subr.mxu0 %v2299
      %v2301 = vand.u32 %v1621, 4294901760
      %2302 = vmatpush1.msra.mxu0 %v2301
      %v2303 = vand.u32 %v1633, 4294901760
      %2304 = vmatprep.subr.mxu0 %v2303
      %v2305 = vand.u32 %v1632, 4294901760
      %2306 = vmatpush1.msra.mxu0 %v2305
      %v2307 = vand.u32 %v1644, 4294901760
      %2308 = vmatprep.subr.mxu0 %v2307
      %v2309 = vand.u32 %v1643, 4294901760
      %2310 = vmatpush1.msra.mxu0 %v2309
      %v2311 = vand.u32 %v1655, 4294901760
      %2312 = vmatprep.subr.mxu0 %v2311
      %v2313 = vand.u32 %v1654, 4294901760
      %2314 = vmatpush1.msra.mxu0 %v2313
      %v2315 = vand.u32 %v1666, 4294901760
      %2316 = vmatprep.subr.mxu0 %v2315
      %v2317 = vand.u32 %v1665, 4294901760
      %2318 = vmatpush1.msra.mxu0 %v2317
      %v2319 = vand.u32 %v1677, 4294901760
      %2320 = vmatprep.subr.mxu0 %v2319
      %v2321 = vand.u32 %v1676, 4294901760
      %2322 = vmatpush1.msra.mxu0 %v2321
      %v2323 = vand.u32 %v1688, 4294901760
      %2324 = vmatprep.subr.mxu0 %v2323
      %v2325 = vand.u32 %v1687, 4294901760
      %2326 = vmatpush1.msra.mxu0 %v2325
      %v2327 = vand.u32 %v1699, 4294901760
      %2328 = vmatprep.subr.mxu0 %v2327
      %v2329 = vand.u32 %v1698, 4294901760
      %2330 = vmatpush1.msra.mxu0 %v2329
      %2331 = vmatprep.subr.mxu0 0.0
      %2332 = vmatpush1.msra.mxu0 0.0
      %2333 = vmatprep.subr.mxu0 0.0
      %2334 = vmatpush1.msra.mxu0 0.0
      %2335 = vmatprep.subr.mxu0 0.0
      %2336 = vmatpush1.msra.mxu0 0.0
      %2337 = vmatprep.subr.mxu0 0.0
      %2338 = vmatpush1.msra.mxu0 0.0
      %2339 = vmatprep.subr.mxu0 0.0
      %2340 = vmatpush1.msra.mxu0 0.0
      %2341 = vmatprep.subr.mxu0 0.0
      %2342 = vmatpush1.msra.mxu0 0.0
      %2343 = vmatprep.subr.mxu0 0.0
      %2344 = vmatpush1.msra.mxu0 0.0
      %2345 = vmatprep.subr.mxu0 0.0
      %2346 = vmatpush1.msra.mxu0 0.0
      %2347 = vmatprep.subr.mxu0 0.0
      %2348 = vmatpush1.msra.mxu0 0.0
      %2349 = vmatprep.subr.mxu0 0.0
      %2350 = vmatpush1.msra.mxu0 0.0
      %2351 = vmatprep.subr.mxu0 0.0
      %2352 = vmatpush1.msra.mxu0 0.0
      %2353 = vmatprep.subr.mxu0 0.0
      %2354 = vmatpush1.msra.mxu0 0.0
      %2355 = vmatprep.subr.mxu0 0.0
      %2356 = vmatpush1.msra.mxu0 0.0
      %2357 = vmatprep.subr.mxu0 0.0
      %2358 = vmatpush1.msra.mxu0 0.0
      %2359 = vmatprep.subr.mxu0 0.0
      %2360 = vmatpush1.msra.mxu0 0.0
      %2361 = vmatprep.subr.mxu0 0.0
      %2362 = vmatpush1.msra.mxu0 0.0
      %2363 = vmatprep.subr.mxu0 0.0
      %2364 = vmatpush1.msra.mxu0 0.0
      %2365 = vmatprep.subr.mxu0 0.0
      %2366 = vmatpush1.msra.mxu0 0.0
      %2367 = vmatprep.subr.mxu0 0.0
      %2368 = vmatpush1.msra.mxu0 0.0
      %2369 = vmatprep.subr.mxu0 0.0
      %2370 = vmatpush1.msra.mxu0 0.0
      %2371 = vmatprep.subr.mxu0 0.0
      %2372 = vmatpush1.msra.mxu0 0.0
      %2373 = vmatprep.subr.mxu0 0.0
      %2374 = vmatpush1.msra.mxu0 0.0
      %2375 = vmatprep.subr.mxu0 0.0
      %2376 = vmatpush1.msra.mxu0 0.0
      %2377 = vmatprep.mubr.f32.mxu0 0.0
      %v2378 = vand.u32 %v1710, 4294901760
      %2379 = vmatmul.mubr.f32.gmra.mrb[0].mxu0 %v2378
      %v2380 = vpop.f32.mrb[0].mxu0
      %v2381 = vadd.f32 %v2291, %v2380
      %v2382 = vpop.f32.mrb[0].mxu0
      %v2383 = vadd.f32 %v2293, %v2382
      %2384 = vdwg.mxu0
      %2385 = vmatprep.subr.mxu0 0.0
      %v2386 = vand.u32 %v1610, 4294901760
      %2387 = vmatpush1.msra.mxu0 %v2386
      %2388 = vmatprep.subr.mxu0 0.0
      %v2389 = vand.u32 %v1620, 4294901760
      %2390 = vmatpush1.msra.mxu0 %v2389
      %2391 = vmatprep.subr.mxu0 0.0
      %v2392 = vand.u32 %v1631, 4294901760
      %2393 = vmatpush1.msra.mxu0 %v2392
      %2394 = vmatprep.subr.mxu0 0.0
      %v2395 = vand.u32 %v1642, 4294901760
      %2396 = vmatpush1.msra.mxu0 %v2395
      %2397 = vmatprep.subr.mxu0 0.0
      %v2398 = vand.u32 %v1653, 4294901760
      %2399 = vmatpush1.msra.mxu0 %v2398
      %2400 = vmatprep.subr.mxu0 0.0
      %v2401 = vand.u32 %v1664, 4294901760
      %2402 = vmatpush1.msra.mxu0 %v2401
      %2403 = vmatprep.subr.mxu0 0.0
      %v2404 = vand.u32 %v1675, 4294901760
      %2405 = vmatpush1.msra.mxu0 %v2404
      %2406 = vmatprep.subr.mxu0 0.0
      %v2407 = vand.u32 %v1686, 4294901760
      %2408 = vmatpush1.msra.mxu0 %v2407
      %2409 = vmatprep.subr.mxu0 0.0
      %v2410 = vand.u32 %v1697, 4294901760
      %2411 = vmatpush1.msra.mxu0 %v2410
      %2412 = vmatprep.subr.mxu0 0.0
      %2413 = vmatpush1.msra.mxu0 0.0
      %2414 = vmatprep.subr.mxu0 0.0
      %2415 = vmatpush1.msra.mxu0 0.0
      %2416 = vmatprep.subr.mxu0 0.0
      %2417 = vmatpush1.msra.mxu0 0.0
      %2418 = vmatprep.subr.mxu0 0.0
      %2419 = vmatpush1.msra.mxu0 0.0
      %2420 = vmatprep.subr.mxu0 0.0
      %2421 = vmatpush1.msra.mxu0 0.0
      %2422 = vmatprep.subr.mxu0 0.0
      %2423 = vmatpush1.msra.mxu0 0.0
      %2424 = vmatprep.subr.mxu0 0.0
      %2425 = vmatpush1.msra.mxu0 0.0
      %2426 = vmatprep.subr.mxu0 0.0
      %2427 = vmatpush1.msra.mxu0 0.0
      %2428 = vmatprep.subr.mxu0 0.0
      %2429 = vmatpush1.msra.mxu0 0.0
      %2430 = vmatprep.subr.mxu0 0.0
      %2431 = vmatpush1.msra.mxu0 0.0
      %2432 = vmatprep.subr.mxu0 0.0
      %2433 = vmatpush1.msra.mxu0 0.0
      %2434 = vmatprep.subr.mxu0 0.0
      %2435 = vmatpush1.msra.mxu0 0.0
      %2436 = vmatprep.subr.mxu0 0.0
      %2437 = vmatpush1.msra.mxu0 0.0
      %2438 = vmatprep.subr.mxu0 0.0
      %2439 = vmatpush1.msra.mxu0 0.0
      %2440 = vmatprep.subr.mxu0 0.0
      %2441 = vmatpush1.msra.mxu0 0.0
      %2442 = vmatprep.subr.mxu0 0.0
      %2443 = vmatpush1.msra.mxu0 0.0
      %2444 = vmatprep.subr.mxu0 0.0
      %2445 = vmatpush1.msra.mxu0 0.0
      %2446 = vmatprep.subr.mxu0 0.0
      %2447 = vmatpush1.msra.mxu0 0.0
      %2448 = vmatprep.subr.mxu0 0.0
      %2449 = vmatpush1.msra.mxu0 0.0
      %2450 = vmatprep.subr.mxu0 0.0
      %2451 = vmatpush1.msra.mxu0 0.0
      %2452 = vmatprep.subr.mxu0 0.0
      %2453 = vmatpush1.msra.mxu0 0.0
      %2454 = vmatprep.subr.mxu0 0.0
      %2455 = vmatpush1.msra.mxu0 0.0
      %2456 = vmatprep.subr.mxu0 0.0
      %2457 = vmatpush1.msra.mxu0 0.0
      %2458 = vmatprep.mubr.f32.mxu0 0.0
      %v2459 = vand.u32 %v1710, 4294901760
      %v2460 = vsub.f32 %v1710, %v2459
      %v2461 = vand.u32 %v2460, 4294901760
      %v2462 = vsub.f32 %v2460, %v2461
      %v2463 = vand.u32 %v2462, 4294901760
      %2464 = vmatmul.mubr.f32.gmra.mrb[0].mxu0 %v2463
      %v2465 = vpop.f32.mrb[0].mxu0
      %v2466 = vadd.f32 %v1707, %v2465
      %v2467 = vpop.f32.mrb[0].mxu0
      %2468 = vdwg.mxu0
      %2469 = vmatprep.subr.mxu0 0.0
      %v2470 = vand.u32 %v1610, 4294901760
      %v2471 = vsub.f32 %v1610, %v2470
      %v2472 = vand.u32 %v2471, 4294901760
      %v2473 = vsub.f32 %v2471, %v2472
      %v2474 = vand.u32 %v2473, 4294901760
      %2475 = vmatpush1.msra.mxu0 %v2474
      %2476 = vmatprep.subr.mxu0 0.0
      %v2477 = vand.u32 %v1620, 4294901760
      %v2478 = vsub.f32 %v1620, %v2477
      %v2479 = vand.u32 %v2478, 4294901760
      %v2480 = vsub.f32 %v2478, %v2479
      %v2481 = vand.u32 %v2480, 4294901760
      %2482 = vmatpush1.msra.mxu0 %v2481
      %2483 = vmatprep.subr.mxu0 0.0
      %v2484 = vand.u32 %v1631, 4294901760
      %v2485 = vsub.f32 %v1631, %v2484
      %v2486 = vand.u32 %v2485, 4294901760
      %v2487 = vsub.f32 %v2485, %v2486
      %v2488 = vand.u32 %v2487, 4294901760
      %2489 = vmatpush1.msra.mxu0 %v2488
      %2490 = vmatprep.subr.mxu0 0.0
      %v2491 = vand.u32 %v1642, 4294901760
      %v2492 = vsub.f32 %v1642, %v2491
      %v2493 = vand.u32 %v2492, 4294901760
      %v2494 = vsub.f32 %v2492, %v2493
      %v2495 = vand.u32 %v2494, 4294901760
      %2496 = vmatpush1.msra.mxu0 %v2495
      %2497 = vmatprep.subr.mxu0 0.0
      %v2498 = vand.u32 %v1653, 4294901760
      %v2499 = vsub.f32 %v1653, %v2498
      %v2500 = vand.u32 %v2499, 4294901760
      %v2501 = vsub.f32 %v2499, %v2500
      %v2502 = vand.u32 %v2501, 4294901760
      %2503 = vmatpush1.msra.mxu0 %v2502
      %2504 = vmatprep.subr.mxu0 0.0
      %v2505 = vand.u32 %v1664, 4294901760
      %v2506 = vsub.f32 %v1664, %v2505
      %v2507 = vand.u32 %v2506, 4294901760
      %v2508 = vsub.f32 %v2506, %v2507
      %v2509 = vand.u32 %v2508, 4294901760
      %2510 = vmatpush1.msra.mxu0 %v2509
      %2511 = vmatprep.subr.mxu0 0.0
      %v2512 = vand.u32 %v1675, 4294901760
      %v2513 = vsub.f32 %v1675, %v2512
      %v2514 = vand.u32 %v2513, 4294901760
      %v2515 = vsub.f32 %v2513, %v2514
      %v2516 = vand.u32 %v2515, 4294901760
      %2517 = vmatpush1.msra.mxu0 %v2516
      %2518 = vmatprep.subr.mxu0 0.0
      %v2519 = vand.u32 %v1686, 4294901760
      %v2520 = vsub.f32 %v1686, %v2519
      %v2521 = vand.u32 %v2520, 4294901760
      %v2522 = vsub.f32 %v2520, %v2521
      %v2523 = vand.u32 %v2522, 4294901760
      %2524 = vmatpush1.msra.mxu0 %v2523
      %2525 = vmatprep.subr.mxu0 0.0
      %v2526 = vand.u32 %v1697, 4294901760
      %v2527 = vsub.f32 %v1697, %v2526
      %v2528 = vand.u32 %v2527, 4294901760
      %v2529 = vsub.f32 %v2527, %v2528
      %v2530 = vand.u32 %v2529, 4294901760
      %2531 = vmatpush1.msra.mxu0 %v2530
      %2532 = vmatprep.subr.mxu0 0.0
      %2533 = vmatpush1.msra.mxu0 0.0
      %2534 = vmatprep.subr.mxu0 0.0
      %2535 = vmatpush1.msra.mxu0 0.0
      %2536 = vmatprep.subr.mxu0 0.0
      %2537 = vmatpush1.msra.mxu0 0.0
      %2538 = vmatprep.subr.mxu0 0.0
      %2539 = vmatpush1.msra.mxu0 0.0
      %2540 = vmatprep.subr.mxu0 0.0
      %2541 = vmatpush1.msra.mxu0 0.0
      %2542 = vmatprep.subr.mxu0 0.0
      %2543 = vmatpush1.msra.mxu0 0.0
      %2544 = vmatprep.subr.mxu0 0.0
      %2545 = vmatpush1.msra.mxu0 0.0
      %2546 = vmatprep.subr.mxu0 0.0
      %2547 = vmatpush1.msra.mxu0 0.0
      %2548 = vmatprep.subr.mxu0 0.0
      %2549 = vmatpush1.msra.mxu0 0.0
      %2550 = vmatprep.subr.mxu0 0.0
      %2551 = vmatpush1.msra.mxu0 0.0
      %2552 = vmatprep.subr.mxu0 0.0
      %2553 = vmatpush1.msra.mxu0 0.0
      %2554 = vmatprep.subr.mxu0 0.0
      %2555 = vmatpush1.msra.mxu0 0.0
      %2556 = vmatprep.subr.mxu0 0.0
      %2557 = vmatpush1.msra.mxu0 0.0
      %2558 = vmatprep.subr.mxu0 0.0
      %2559 = vmatpush1.msra.mxu0 0.0
      %2560 = vmatprep.subr.mxu0 0.0
      %2561 = vmatpush1.msra.mxu0 0.0
      %2562 = vmatprep.subr.mxu0 0.0
      %2563 = vmatpush1.msra.mxu0 0.0
      %2564 = vmatprep.subr.mxu0 0.0
      %2565 = vmatpush1.msra.mxu0 0.0
      %2566 = vmatprep.subr.mxu0 0.0
      %2567 = vmatpush1.msra.mxu0 0.0
      %2568 = vmatprep.subr.mxu0 0.0
      %2569 = vmatpush1.msra.mxu0 0.0
      %2570 = vmatprep.subr.mxu0 0.0
      %2571 = vmatpush1.msra.mxu0 0.0
      %2572 = vmatprep.subr.mxu0 0.0
      %2573 = vmatpush1.msra.mxu0 0.0
      %2574 = vmatprep.subr.mxu0 0.0
      %2575 = vmatpush1.msra.mxu0 0.0
      %2576 = vmatprep.subr.mxu0 0.0
      %2577 = vmatpush1.msra.mxu0 0.0
      %2578 = vmatprep.mubr.f32.mxu0 0.0
      %v2579 = vand.u32 %v1710, 4294901760
      %2580 = vmatmul.mubr.f32.gmra.mrb[0].mxu0 %v2579
      %v2581 = vpop.f32.mrb[0].mxu0
      %v2582 = vadd.f32 %v2466, %v2581
      %v2583 = vpop.f32.mrb[0].mxu0
      %2584 = vdwg.mxu0
      %2585 = vmatprep.subr.mxu0 0.0
      %v2586 = vand.u32 %v1610, 4294901760
      %v2587 = vsub.f32 %v1610, %v2586
      %2588 = vmatpush1.msra.mxu0 %v2587
      %2589 = vmatprep.subr.mxu0 0.0
      %v2590 = vand.u32 %v1620, 4294901760
      %v2591 = vsub.f32 %v1620, %v2590
      %2592 = vmatpush1.msra.mxu0 %v2591
      %2593 = vmatprep.subr.mxu0 0.0
      %v2594 = vand.u32 %v1631, 4294901760
      %v2595 = vsub.f32 %v1631, %v2594
      %2596 = vmatpush1.msra.mxu0 %v2595
      %2597 = vmatprep.subr.mxu0 0.0
      %v2598 = vand.u32 %v1642, 4294901760
      %v2599 = vsub.f32 %v1642, %v2598
      %2600 = vmatpush1.msra.mxu0 %v2599
      %2601 = vmatprep.subr.mxu0 0.0
      %v2602 = vand.u32 %v1653, 4294901760
      %v2603 = vsub.f32 %v1653, %v2602
      %2604 = vmatpush1.msra.mxu0 %v2603
      %2605 = vmatprep.subr.mxu0 0.0
      %v2606 = vand.u32 %v1664, 4294901760
      %v2607 = vsub.f32 %v1664, %v2606
      %2608 = vmatpush1.msra.mxu0 %v2607
      %2609 = vmatprep.subr.mxu0 0.0
      %v2610 = vand.u32 %v1675, 4294901760
      %v2611 = vsub.f32 %v1675, %v2610
      %2612 = vmatpush1.msra.mxu0 %v2611
      %2613 = vmatprep.subr.mxu0 0.0
      %v2614 = vand.u32 %v1686, 4294901760
      %v2615 = vsub.f32 %v1686, %v2614
      %2616 = vmatpush1.msra.mxu0 %v2615
      %2617 = vmatprep.subr.mxu0 0.0
      %v2618 = vand.u32 %v1697, 4294901760
      %v2619 = vsub.f32 %v1697, %v2618
      %2620 = vmatpush1.msra.mxu0 %v2619
      %2621 = vmatprep.subr.mxu0 0.0
      %2622 = vmatpush1.msra.mxu0 0.0
      %2623 = vmatprep.subr.mxu0 0.0
      %2624 = vmatpush1.msra.mxu0 0.0
      %2625 = vmatprep.subr.mxu0 0.0
      %2626 = vmatpush1.msra.mxu0 0.0
      %2627 = vmatprep.subr.mxu0 0.0
      %2628 = vmatpush1.msra.mxu0 0.0
      %2629 = vmatprep.subr.mxu0 0.0
      %2630 = vmatpush1.msra.mxu0 0.0
      %2631 = vmatprep.subr.mxu0 0.0
      %2632 = vmatpush1.msra.mxu0 0.0
      %2633 = vmatprep.subr.mxu0 0.0
      %2634 = vmatpush1.msra.mxu0 0.0
      %2635 = vmatprep.subr.mxu0 0.0
      %2636 = vmatpush1.msra.mxu0 0.0
      %2637 = vmatprep.subr.mxu0 0.0
      %2638 = vmatpush1.msra.mxu0 0.0
      %2639 = vmatprep.subr.mxu0 0.0
      %2640 = vmatpush1.msra.mxu0 0.0
      %2641 = vmatprep.subr.mxu0 0.0
      %2642 = vmatpush1.msra.mxu0 0.0
      %2643 = vmatprep.subr.mxu0 0.0
      %2644 = vmatpush1.msra.mxu0 0.0
      %2645 = vmatprep.subr.mxu0 0.0
      %2646 = vmatpush1.msra.mxu0 0.0
      %2647 = vmatprep.subr.mxu0 0.0
      %2648 = vmatpush1.msra.mxu0 0.0
      %2649 = vmatprep.subr.mxu0 0.0
      %2650 = vmatpush1.msra.mxu0 0.0
      %2651 = vmatprep.subr.mxu0 0.0
      %2652 = vmatpush1.msra.mxu0 0.0
      %2653 = vmatprep.subr.mxu0 0.0
      %2654 = vmatpush1.msra.mxu0 0.0
      %2655 = vmatprep.subr.mxu0 0.0
      %2656 = vmatpush1.msra.mxu0 0.0
      %2657 = vmatprep.subr.mxu0 0.0
      %2658 = vmatpush1.msra.mxu0 0.0
      %2659 = vmatprep.subr.mxu0 0.0
      %2660 = vmatpush1.msra.mxu0 0.0
      %2661 = vmatprep.subr.mxu0 0.0
      %2662 = vmatpush1.msra.mxu0 0.0
      %2663 = vmatprep.subr.mxu0 0.0
      %2664 = vmatpush1.msra.mxu0 0.0
      %2665 = vmatprep.subr.mxu0 0.0
      %2666 = vmatpush1.msra.mxu0 0.0
      %2667 = vmatprep.mubr.f32.mxu0 0.0
      %v2668 = vand.u32 %v1710, 4294901760
      %v2669 = vsub.f32 %v1710, %v2668
      %2670 = vmatmul.mubr.f32.gmra.mrb[0].mxu0 %v2669
      %v2671 = vpop.f32.mrb[0].mxu0
      %v2672 = vadd.f32 %v2582, %v2671
      %v2673 = vpop.f32.mrb[0].mxu0
      %2674 = vdwg.mxu0
      %2675 = vmatprep.subr.mxu0 0.0
      %v2676 = vand.u32 %v1610, 4294901760
      %2677 = vmatpush1.msra.mxu0 %v2676
      %2678 = vmatprep.subr.mxu0 0.0
      %v2679 = vand.u32 %v1620, 4294901760
      %2680 = vmatpush1.msra.mxu0 %v2679
      %2681 = vmatprep.subr.mxu0 0.0
      %v2682 = vand.u32 %v1631, 4294901760
      %2683 = vmatpush1.msra.mxu0 %v2682
      %2684 = vmatprep.subr.mxu0 0.0
      %v2685 = vand.u32 %v1642, 4294901760
      %2686 = vmatpush1.msra.mxu0 %v2685
      %2687 = vmatprep.subr.mxu0 0.0
      %v2688 = vand.u32 %v1653, 4294901760
      %2689 = vmatpush1.msra.mxu0 %v2688
      %2690 = vmatprep.subr.mxu0 0.0
      %v2691 = vand.u32 %v1664, 4294901760
      %2692 = vmatpush1.msra.mxu0 %v2691
      %2693 = vmatprep.subr.mxu0 0.0
      %v2694 = vand.u32 %v1675, 4294901760
      %2695 = vmatpush1.msra.mxu0 %v2694
      %2696 = vmatprep.subr.mxu0 0.0
      %v2697 = vand.u32 %v1686, 4294901760
      %2698 = vmatpush1.msra.mxu0 %v2697
      %2699 = vmatprep.subr.mxu0 0.0
      %v2700 = vand.u32 %v1697, 4294901760
      %2701 = vmatpush1.msra.mxu0 %v2700
      %2702 = vmatprep.subr.mxu0 0.0
      %2703 = vmatpush1.msra.mxu0 0.0
      %2704 = vmatprep.subr.mxu0 0.0
      %2705 = vmatpush1.msra.mxu0 0.0
      %2706 = vmatprep.subr.mxu0 0.0
      %2707 = vmatpush1.msra.mxu0 0.0
      %2708 = vmatprep.subr.mxu0 0.0
      %2709 = vmatpush1.msra.mxu0 0.0
      %2710 = vmatprep.subr.mxu0 0.0
      %2711 = vmatpush1.msra.mxu0 0.0
      %2712 = vmatprep.subr.mxu0 0.0
      %2713 = vmatpush1.msra.mxu0 0.0
      %2714 = vmatprep.subr.mxu0 0.0
      %2715 = vmatpush1.msra.mxu0 0.0
      %2716 = vmatprep.subr.mxu0 0.0
      %2717 = vmatpush1.msra.mxu0 0.0
      %2718 = vmatprep.subr.mxu0 0.0
      %2719 = vmatpush1.msra.mxu0 0.0
      %2720 = vmatprep.subr.mxu0 0.0
      %2721 = vmatpush1.msra.mxu0 0.0
      %2722 = vmatprep.subr.mxu0 0.0
      %2723 = vmatpush1.msra.mxu0 0.0
      %2724 = vmatprep.subr.mxu0 0.0
      %2725 = vmatpush1.msra.mxu0 0.0
      %2726 = vmatprep.subr.mxu0 0.0
      %2727 = vmatpush1.msra.mxu0 0.0
      %2728 = vmatprep.subr.mxu0 0.0
      %2729 = vmatpush1.msra.mxu0 0.0
      %2730 = vmatprep.subr.mxu0 0.0
      %2731 = vmatpush1.msra.mxu0 0.0
      %2732 = vmatprep.subr.mxu0 0.0
      %2733 = vmatpush1.msra.mxu0 0.0
      %2734 = vmatprep.subr.mxu0 0.0
      %2735 = vmatpush1.msra.mxu0 0.0
      %2736 = vmatprep.subr.mxu0 0.0
      %2737 = vmatpush1.msra.mxu0 0.0
      %2738 = vmatprep.subr.mxu0 0.0
      %2739 = vmatpush1.msra.mxu0 0.0
      %2740 = vmatprep.subr.mxu0 0.0
      %2741 = vmatpush1.msra.mxu0 0.0
      %2742 = vmatprep.subr.mxu0 0.0
      %2743 = vmatpush1.msra.mxu0 0.0
      %2744 = vmatprep.subr.mxu0 0.0
      %2745 = vmatpush1.msra.mxu0 0.0
      %2746 = vmatprep.subr.mxu0 0.0
      %2747 = vmatpush1.msra.mxu0 0.0
      %2748 = vmatprep.mubr.f32.mxu0 0.0
      %v2749 = vand.u32 %v1710, 4294901760
      %v2750 = vsub.f32 %v1710, %v2749
      %v2751 = vand.u32 %v2750, 4294901760
      %2752 = vmatmul.mubr.f32.gmra.mrb[0].mxu0 %v2751
      %v2753 = vpop.f32.mrb[0].mxu0
      %v2754 = vadd.f32 %v2672, %v2753
      %v2755 = vpop.f32.mrb[0].mxu0
      %2756 = vdwg.mxu0
      %2757 = vmatprep.subr.mxu0 0.0
      %v2758 = vand.u32 %v1610, 4294901760
      %v2759 = vsub.f32 %v1610, %v2758
      %v2760 = vand.u32 %v2759, 4294901760
      %2761 = vmatpush1.msra.mxu0 %v2760
      %2762 = vmatprep.subr.mxu0 0.0
      %v2763 = vand.u32 %v1620, 4294901760
      %v2764 = vsub.f32 %v1620, %v2763
      %v2765 = vand.u32 %v2764, 4294901760
      %2766 = vmatpush1.msra.mxu0 %v2765
      %2767 = vmatprep.subr.mxu0 0.0
      %v2768 = vand.u32 %v1631, 4294901760
      %v2769 = vsub.f32 %v1631, %v2768
      %v2770 = vand.u32 %v2769, 4294901760
      %2771 = vmatpush1.msra.mxu0 %v2770
      %2772 = vmatprep.subr.mxu0 0.0
      %v2773 = vand.u32 %v1642, 4294901760
      %v2774 = vsub.f32 %v1642, %v2773
      %v2775 = vand.u32 %v2774, 4294901760
      %2776 = vmatpush1.msra.mxu0 %v2775
      %2777 = vmatprep.subr.mxu0 0.0
      %v2778 = vand.u32 %v1653, 4294901760
      %v2779 = vsub.f32 %v1653, %v2778
      %v2780 = vand.u32 %v2779, 4294901760
      %2781 = vmatpush1.msra.mxu0 %v2780
      %2782 = vmatprep.subr.mxu0 0.0
      %v2783 = vand.u32 %v1664, 4294901760
      %v2784 = vsub.f32 %v1664, %v2783
      %v2785 = vand.u32 %v2784, 4294901760
      %2786 = vmatpush1.msra.mxu0 %v2785
      %2787 = vmatprep.subr.mxu0 0.0
      %v2788 = vand.u32 %v1675, 4294901760
      %v2789 = vsub.f32 %v1675, %v2788
      %v2790 = vand.u32 %v2789, 4294901760
      %2791 = vmatpush1.msra.mxu0 %v2790
      %2792 = vmatprep.subr.mxu0 0.0
      %v2793 = vand.u32 %v1686, 4294901760
      %v2794 = vsub.f32 %v1686, %v2793
      %v2795 = vand.u32 %v2794, 4294901760
      %2796 = vmatpush1.msra.mxu0 %v2795
      %2797 = vmatprep.subr.mxu0 0.0
      %v2798 = vand.u32 %v1697, 4294901760
      %v2799 = vsub.f32 %v1697, %v2798
      %v2800 = vand.u32 %v2799, 4294901760
      %2801 = vmatpush1.msra.mxu0 %v2800
      %2802 = vmatprep.subr.mxu0 0.0
      %2803 = vmatpush1.msra.mxu0 0.0
      %2804 = vmatprep.subr.mxu0 0.0
      %2805 = vmatpush1.msra.mxu0 0.0
      %2806 = vmatprep.subr.mxu0 0.0
      %2807 = vmatpush1.msra.mxu0 0.0
      %2808 = vmatprep.subr.mxu0 0.0
      %2809 = vmatpush1.msra.mxu0 0.0
      %2810 = vmatprep.subr.mxu0 0.0
      %2811 = vmatpush1.msra.mxu0 0.0
      %2812 = vmatprep.subr.mxu0 0.0
      %2813 = vmatpush1.msra.mxu0 0.0
      %2814 = vmatprep.subr.mxu0 0.0
      %2815 = vmatpush1.msra.mxu0 0.0
      %2816 = vmatprep.subr.mxu0 0.0
      %2817 = vmatpush1.msra.mxu0 0.0
      %2818 = vmatprep.subr.mxu0 0.0
      %2819 = vmatpush1.msra.mxu0 0.0
      %2820 = vmatprep.subr.mxu0 0.0
      %2821 = vmatpush1.msra.mxu0 0.0
      %2822 = vmatprep.subr.mxu0 0.0
      %2823 = vmatpush1.msra.mxu0 0.0
      %2824 = vmatprep.subr.mxu0 0.0
      %2825 = vmatpush1.msra.mxu0 0.0
      %2826 = vmatprep.subr.mxu0 0.0
      %2827 = vmatpush1.msra.mxu0 0.0
      %2828 = vmatprep.subr.mxu0 0.0
      %2829 = vmatpush1.msra.mxu0 0.0
      %2830 = vmatprep.subr.mxu0 0.0
      %2831 = vmatpush1.msra.mxu0 0.0
      %2832 = vmatprep.subr.mxu0 0.0
      %2833 = vmatpush1.msra.mxu0 0.0
      %2834 = vmatprep.subr.mxu0 0.0
      %2835 = vmatpush1.msra.mxu0 0.0
      %2836 = vmatprep.subr.mxu0 0.0
      %2837 = vmatpush1.msra.mxu0 0.0
      %2838 = vmatprep.subr.mxu0 0.0
      %2839 = vmatpush1.msra.mxu0 0.0
      %2840 = vmatprep.subr.mxu0 0.0
      %2841 = vmatpush1.msra.mxu0 0.0
      %2842 = vmatprep.subr.mxu0 0.0
      %2843 = vmatpush1.msra.mxu0 0.0
      %2844 = vmatprep.subr.mxu0 0.0
      %2845 = vmatpush1.msra.mxu0 0.0
      %2846 = vmatprep.subr.mxu0 0.0
      %2847 = vmatpush1.msra.mxu0 0.0
      %2848 = vmatprep.mubr.f32.mxu0 0.0
      %v2849 = vand.u32 %v1710, 4294901760
      %2850 = vmatmul.mubr.f32.gmra.mrb[0].mxu0 %v2849
      %v2851 = vpop.f32.mrb[0].mxu0
      %v2852 = vadd.f32 %v2754, %v2851
      %v2853 = vpop.f32.mrb[0].mxu0
      %2854 = vdwg.mxu0
      %2855 = vmatprep.subr.mxu0 0.0
      %v2856 = vand.u32 %v1610, 4294901760
      %2857 = vmatpush1.msra.mxu0 %v2856
      %2858 = vmatprep.subr.mxu0 0.0
      %v2859 = vand.u32 %v1620, 4294901760
      %2860 = vmatpush1.msra.mxu0 %v2859
      %2861 = vmatprep.subr.mxu0 0.0
      %v2862 = vand.u32 %v1631, 4294901760
      %2863 = vmatpush1.msra.mxu0 %v2862
      %2864 = vmatprep.subr.mxu0 0.0
      %v2865 = vand.u32 %v1642, 4294901760
      %2866 = vmatpush1.msra.mxu0 %v2865
      %2867 = vmatprep.subr.mxu0 0.0
      %v2868 = vand.u32 %v1653, 4294901760
      %2869 = vmatpush1.msra.mxu0 %v2868
      %2870 = vmatprep.subr.mxu0 0.0
      %v2871 = vand.u32 %v1664, 4294901760
      %2872 = vmatpush1.msra.mxu0 %v2871
      %2873 = vmatprep.subr.mxu0 0.0
      %v2874 = vand.u32 %v1675, 4294901760
      %2875 = vmatpush1.msra.mxu0 %v2874
      %2876 = vmatprep.subr.mxu0 0.0
      %v2877 = vand.u32 %v1686, 4294901760
      %2878 = vmatpush1.msra.mxu0 %v2877
      %2879 = vmatprep.subr.mxu0 0.0
      %v2880 = vand.u32 %v1697, 4294901760
      %2881 = vmatpush1.msra.mxu0 %v2880
      %2882 = vmatprep.subr.mxu0 0.0
      %2883 = vmatpush1.msra.mxu0 0.0
      %2884 = vmatprep.subr.mxu0 0.0
      %2885 = vmatpush1.msra.mxu0 0.0
      %2886 = vmatprep.subr.mxu0 0.0
      %2887 = vmatpush1.msra.mxu0 0.0
      %2888 = vmatprep.subr.mxu0 0.0
      %2889 = vmatpush1.msra.mxu0 0.0
      %2890 = vmatprep.subr.mxu0 0.0
      %2891 = vmatpush1.msra.mxu0 0.0
      %2892 = vmatprep.subr.mxu0 0.0
      %2893 = vmatpush1.msra.mxu0 0.0
      %2894 = vmatprep.subr.mxu0 0.0
      %2895 = vmatpush1.msra.mxu0 0.0
      %2896 = vmatprep.subr.mxu0 0.0
      %2897 = vmatpush1.msra.mxu0 0.0
      %2898 = vmatprep.subr.mxu0 0.0
      %2899 = vmatpush1.msra.mxu0 0.0
      %2900 = vmatprep.subr.mxu0 0.0
      %2901 = vmatpush1.msra.mxu0 0.0
      %2902 = vmatprep.subr.mxu0 0.0
      %2903 = vmatpush1.msra.mxu0 0.0
      %2904 = vmatprep.subr.mxu0 0.0
      %2905 = vmatpush1.msra.mxu0 0.0
      %2906 = vmatprep.subr.mxu0 0.0
      %2907 = vmatpush1.msra.mxu0 0.0
      %2908 = vmatprep.subr.mxu0 0.0
      %2909 = vmatpush1.msra.mxu0 0.0
      %2910 = vmatprep.subr.mxu0 0.0
      %2911 = vmatpush1.msra.mxu0 0.0
      %2912 = vmatprep.subr.mxu0 0.0
      %2913 = vmatpush1.msra.mxu0 0.0
      %2914 = vmatprep.subr.mxu0 0.0
      %2915 = vmatpush1.msra.mxu0 0.0
      %2916 = vmatprep.subr.mxu0 0.0
      %2917 = vmatpush1.msra.mxu0 0.0
      %2918 = vmatprep.subr.mxu0 0.0
      %2919 = vmatpush1.msra.mxu0 0.0
      %2920 = vmatprep.subr.mxu0 0.0
      %2921 = vmatpush1.msra.mxu0 0.0
      %2922 = vmatprep.subr.mxu0 0.0
      %2923 = vmatpush1.msra.mxu0 0.0
      %2924 = vmatprep.subr.mxu0 0.0
      %2925 = vmatpush1.msra.mxu0 0.0
      %2926 = vmatprep.subr.mxu0 0.0
      %2927 = vmatpush1.msra.mxu0 0.0
      %2928 = vmatprep.mubr.f32.mxu0 0.0
      %v2929 = vand.u32 %v1710, 4294901760
      %2930 = vmatmul.mubr.f32.gmra.mrb[0].mxu0 %v2929
      %v2931 = vpop.f32.mrb[0].mxu0
      %v2932 = vadd.f32 %v2852, %v2931
      %v2933 = vpop.f32.mrb[0].mxu0
      %2934 = vdwg.mxu0
      %v2935 = vmax.f32 %v2381, 0.0
      %v2936 = vmax.f32 %v2383, 0.0
      %v2937 = vmax.f32 %v2932, 0.0
      %2938 = vst [vmem:[%s251] sm:$0xff] %v2935
      %2939 = vst [vmem:[%s251 + $0x8] sm:$0xff] %v2936
      %vm2940 = vcmask 244736
      %2941 = vst.msk [vmem:[%s251 + $0x10] sm:$0xff] %vm2940, %v2937
      %p2942 = scmp.lt.s32.totalorder %s17, 1
      %s2943 = scalar_select %p2942, %s17, 1
      %s2944 = smul.addr %s2943, 3
      %s2945 = smul.addr %s2944, 8
      %s2946 = scalar_lea.vmem %s6, %s2945
      // Predicated region
      $region45: #{conv_block_apply.1} parent=43 // pred_check
        %p2947 = pneg %p166
      $region46: #{conv_block_apply.1} parent=43 // pred_check_branch
        %2949 = sbr.rel (%p2947) target = $region48
      $region47: #{conv_block_apply.1} parent=43 // pred_region
        _
      $region48: #{conv_block_apply.1} parent=43 // pred_fallthru
        _
    $region44: #{conv_block_apply.1} parent=5 // pred_fallthru
      _
    %p2950 = scmp.le.s32.totalorder 2, %s12
    // Predicated region
    $region49: #{conv_block_apply.1} parent=5 // pred_check
      %p2951 = pneg %p2950
    $region50: #{conv_block_apply.1} parent=5 // pred_check_branch
      %2953 = sbr.rel (%p2951) target = $region52
    $region51: #{conv_block_apply.1} parent=5 // pred_region
      %s2954 = ssub.s32 %s12, 2
      // Predicated region
      $region53: #{conv_block_apply.1} parent=51 // pred_check
        %p2955 = pneg %p172
      $region54: #{conv_block_apply.1} parent=51 // pred_check_branch
        %2957 = sbr.rel (%p2955) target = $region56
      $region55: #{conv_block_apply.1} parent=51 // pred_region
        %p2958 = scmp.lt.s32.totalorder %s18, 1
        %s2959 = scalar_select %p2958, %s18, 1
        %s2960 = smul.addr %s2959, 3
        %s2961 = smul.addr %s2960, 8
        %s2962 = scalar_lea.vmem %s6, %s2961
      $region56: #{conv_block_apply.1} parent=51 // pred_fallthru
        _
    $region52: #{conv_block_apply.1} parent=5 // pred_fallthru
      _
  $region6: #{conv_block_apply.1} parent=0 // loop_footer
    %s16 = sadd.s32 1, %s12
  $region7: #{conv_block_apply.1} parent=0 // loop_footer_branch
    %11 = sbr.rel target = $region3
  $region8: #{conv_block_apply.1} parent=0 // loop_exit
    _

</llo_original>
